<compile_context>
chip_gen: v7x
topology: tpu7x:2x2x1
jax: 0.10.0
libtpu: 0.0.40
codegen_flags: <defaults>
</compile_context>

<pallas_src>
import functools

import jax
import jax.numpy as jnp
from jax.experimental import pallas as pl
from jax.experimental.pallas import tpu as pltpu  # noqa: F401 (TPU backend assumed)

HIDDEN = 128             # BERT_HIDDEN_SIZE stand-in (bert-base is 768)
N_HIDDEN_LAYERS = 2      # config.n_hidden_layers
VOCAB = 64
SEP_TOKEN_ID = VOCAB - 1
N_HEADS = 3
PACKED = N_HEADS * HIDDEN      # 384-wide block-diagonal packing
OUT_PAD = 128                  # lane-dense logits slab width
# Logits-slab column layout.
SENT_LO, SENT_HI = 0, 3        # sentiment (3 classes)
SARC_COL = 3                   # sarcasm   (1 logit)
NEG_COL = 4                    # negation  (1 logit)


# ----------------------------------------------------------------------------
# Kernel: pooler (shared) + all three packed MLP heads in one step
# ----------------------------------------------------------------------------
def fused_kernel(pooled_ref, wp_ref, bp_ref, wh_ref, bh_ref, wo_ref, bo_ref,
                 logits_ref, emb_ref, *, n_layers):
    """pooled_ref : [2, B, H] bf16  (slot 0 = single-sentence, 1 = sentence-pair)
    wp_ref     : [H, H]     bf16  pooler dense weight (shared)
    bp_ref     : [1, H]     f32   pooler dense bias
    wh_ref     : [L, 3H, 3H] bf16 block-diagonal packed hidden-layer weights
    bh_ref     : [L, 1, 3H] f32   packed hidden-layer biases
    wo_ref     : [3H, 128]  bf16  packed output projections (zero-padded lanes)
    bo_ref     : [1, 128]   f32   packed output biases
    logits_ref : [B, 128]   f32   lane-dense logits slab
    emb_ref    : [2, B, H]  f32   pooler embeddings (forward() API)
    """
    wp = wp_ref[...]
    bp = bp_ref[...]

    # Shared BERT-pooler surrogate (dense + tanh), once per distinct input.
    h_single = jnp.tanh(
        jnp.dot(pooled_ref[0], wp, preferred_element_type=jnp.float32) + bp)
    h_pair = jnp.tanh(
        jnp.dot(pooled_ref[1], wp, preferred_element_type=jnp.float32) + bp)
    emb_ref[0] = h_single
    emb_ref[1] = h_pair

    # Pack head activations side by side: [B, 3H]
    #   cols 0:H   -> sentiment head  (single-sentence embedding)
    #   cols H:2H  -> sarcasm head    (single-sentence embedding)
    #   cols 2H:3H -> negation head   (paired-sentence embedding)
    x = jnp.concatenate([h_single, h_single, h_pair], axis=-1)

    # n_layers x (dropout[eval = identity] -> Linear(H,H) -> ReLU) for all
    # three heads at once via the block-diagonal [3H, 3H] weights.
    for l in range(n_layers):                                   # static unroll
        x = jnp.dot(x.astype(jnp.bfloat16), wh_ref[l],
                    preferred_element_type=jnp.float32) + bh_ref[l]
        x = jnp.maximum(x, 0.0)

    # Final dropout (identity) -> packed output projections, lane-dense store.
    logits_ref[...] = jnp.dot(x.astype(jnp.bfloat16), wo_ref[...],
                              preferred_element_type=jnp.float32) + bo_ref[...]


def run_fused(pooled_stack, wp, bp, wh, bh, wo, bo, n_layers):
    """pooled_stack: [2, B, H] bf16 -> (logits [B, 128] f32, emb [2, B, H] f32)."""
    n_in, B, H = pooled_stack.shape
    kernel = functools.partial(fused_kernel, n_layers=n_layers)
    return pl.pallas_call(
        kernel,
        out_shape=(jax.ShapeDtypeStruct((B, OUT_PAD), jnp.float32),
                   jax.ShapeDtypeStruct((n_in, B, H), jnp.float32)),
    )(pooled_stack, wp, bp, wh, bh, wo, bo)


# ----------------------------------------------------------------------------
# Model (parameter container + forward logic; encoder surrogate is JAX glue)
# ----------------------------------------------------------------------------
class MultiTaskSentimentAnalysisPallas:
    def __init__(self, key, hidden=HIDDEN, n_hidden_layers=N_HIDDEN_LAYERS,
                 vocab=VOCAB):
        self.hidden = hidden
        self.n_hidden_layers = n_hidden_layers
        ks = jax.random.split(key, 4)
        bound = 1.0 / jnp.sqrt(hidden)

        def u(k, shape):
            return jax.random.uniform(k, shape, jnp.float32, -bound, bound)

        # Surrogate "BERT": embedding table + pooler dense (weight in bf16).
        self.emb_table = jax.random.normal(ks[0], (vocab, hidden),
                                           jnp.float32) * 0.02
        self.pooler_w = u(ks[1], (hidden, hidden)).astype(jnp.bfloat16)
        self.pooler_b = u(ks[2], (1, hidden))

        # Heads 0=sentiment(3), 1=sarcasm(1), 2=negation(1), packed
        # block-diagonally: hidden layers [L, 3H, 3H], output [3H, 128].
        out_cols = ((SENT_LO, SENT_HI), (SARC_COL, SARC_COL + 1),
                    (NEG_COL, NEG_COL + 1))
        wh = jnp.zeros((n_hidden_layers, PACKED, PACKED), jnp.float32)
        bh = jnp.zeros((n_hidden_layers, 1, PACKED), jnp.float32)
        wo = jnp.zeros((PACKED, OUT_PAD), jnp.float32)
        bo = jnp.zeros((1, OUT_PAD), jnp.float32)
        head_keys = jax.random.split(ks[3], N_HEADS)
        for i, (hk, (c0, c1)) in enumerate(zip(head_keys, out_cols)):
            k1, k2, k3, k4 = jax.random.split(hk, 4)
            r0, r1 = i * hidden, (i + 1) * hidden
            wh = wh.at[:, r0:r1, r0:r1].set(u(k1, (n_hidden_layers, hidden, hidden)))
            bh = bh.at[:, 0, r0:r1].set(u(k2, (n_hidden_layers, hidden)))
            wo = wo.at[r0:r1, c0:c1].set(u(k3, (hidden, c1 - c0)))
            bo = bo.at[0, c0:c1].set(u(k4, (c1 - c0,)))

        self.head_wh = wh.astype(jnp.bfloat16)   # [L, 3H, 3H]
        self.head_bh = bh                        # [L, 1, 3H]
        self.head_wo = wo.astype(jnp.bfloat16)   # [3H, 128]
        self.head_bo = bo                        # [1, 128]

    # --- encoder surrogate (plain-JAX glue; real BERT is untranslatable) ----
    def _pool(self, input_ids, attention_mask):
        emb = jnp.take(self.emb_table, input_ids, axis=0)        # [B, S, H]
        mask = attention_mask.astype(jnp.float32)                # [B, S]
        denom = jnp.maximum(jnp.sum(mask, axis=1, keepdims=True), 1.0)
        return jnp.einsum('bsh,bs->bh', emb, mask) / denom       # [B, H]

    def _paired_ids(self, ids1, mask1, ids2, mask2):
        B = ids1.shape[0]
        sep = jnp.full((B, 1), SEP_TOKEN_ID, dtype=ids1.dtype)
        ones = jnp.ones_like(sep)
        input_ids = jnp.concatenate([ids1, sep, ids2, sep], axis=1)
        attention_mask = jnp.concatenate([mask1, ones, mask2, ones], axis=1)
        return input_ids, attention_mask

    def _fused(self, pooled_single, pooled_pair):
        pooled_stack = jnp.stack([pooled_single,
                                  pooled_pair]).astype(jnp.bfloat16)
        return run_fused(pooled_stack, self.pooler_w, self.pooler_b,
                         self.head_wh, self.head_bh,
                         self.head_wo, self.head_bo,
                         self.n_hidden_layers)

    # --- module API ---------------------------------------------------------
    def forward(self, input_ids, attention_mask, task_id=0):
        """Surrogate for bert(...)['pooler_output']."""
        pooled = self._pool(input_ids, attention_mask)
        _, emb = self._fused(pooled, pooled)
        return emb[0]                                             # [B, H]

    def get_paired_embeddings(self, ids1, mask1, ids2, mask2, task_id):
        input_ids, attention_mask = self._paired_ids(ids1, mask1, ids2, mask2)
        return self.forward(input_ids, attention_mask, task_id=task_id)

    def predict_sentiment(self, input_ids, attention_mask):
        pooled = self._pool(input_ids, attention_mask)
        logits, _ = self._fused(pooled, pooled)
        return logits[:, SENT_LO:SENT_HI]                         # [B, 3]

    def predict_sarcasm(self, input_ids, attention_mask):
        pooled = self._pool(input_ids, attention_mask)
        logits, _ = self._fused(pooled, pooled)
        return logits[:, SARC_COL:SARC_COL + 1]                   # [B, 1]

    def predict_negation(self, ids1, mask1, ids2, mask2):
        pair_ids, pair_mask = self._paired_ids(ids1, mask1, ids2, mask2)
        pooled_pair = self._pool(pair_ids, pair_mask)
        logits, _ = self._fused(pooled_pair, pooled_pair)
        return logits[:, NEG_COL:NEG_COL + 1]                     # [B, 1]

    # --- fully fused path: pooler + all three heads, ONE pallas_call --------
    def predict_all(self, input_ids, attention_mask, input_ids_2,
                    attention_mask_2):
        pooled_single = self._pool(input_ids, attention_mask)
        pair_ids, pair_mask = self._paired_ids(input_ids, attention_mask,
                                               input_ids_2, attention_mask_2)
        pooled_pair = self._pool(pair_ids, pair_mask)
        logits, _ = self._fused(pooled_single, pooled_pair)       # [B, 128]
        return (logits[:, SENT_LO:SENT_HI],
                logits[:, SARC_COL:SARC_COL + 1],
                logits[:, NEG_COL:NEG_COL + 1])


# ----------------------------------------------------------------------------
if __name__ == "__main__":
    key = jax.random.PRNGKey(0)
    k_model, k_ids1, k_ids2, k_m1, k_m2 = jax.random.split(key, 5)

    B, S = 8, 8
    model = MultiTaskSentimentAnalysisPallas(k_model)

    input_ids = jax.random.randint(k_ids1, (B, S), 0, VOCAB, dtype=jnp.int32)
    attention_mask = (jax.random.uniform(k_m1, (B, S)) > 0.2).astype(jnp.int32)

    input_ids_2 = jax.random.randint(k_ids2, (B, S), 0, VOCAB, dtype=jnp.int32)
    attention_mask_2 = (jax.random.uniform(k_m2, (B, S)) > 0.2).astype(jnp.int32)

    # Fused path: one pallas_call produces all three task logits.
    sentiment_logits, sarcasm_logits, negation_logits = model.predict_all(
        input_ids, attention_mask, input_ids_2, attention_mask_2)
    jax.block_until_ready((sentiment_logits, sarcasm_logits, negation_logits))

    assert sentiment_logits.shape == (B, 3)
    assert sarcasm_logits.shape == (B, 1)
    assert negation_logits.shape == (B, 1)

    # Per-task module API still works and matches the fused path.
    sent_single = model.predict_sentiment(input_ids, attention_mask)
    sarc_single = model.predict_sarcasm(input_ids, attention_mask)
    neg_single = model.predict_negation(input_ids, attention_mask,
                                        input_ids_2, attention_mask_2)
    emb = model.forward(input_ids, attention_mask, task_id=0)
    jax.block_until_ready((sent_single, sarc_single, neg_single, emb))

    assert sent_single.shape == (B, 3)
    assert sarc_single.shape == (B, 1)
    assert neg_single.shape == (B, 1)
    assert emb.shape == (B, HIDDEN)
    assert bool(jnp.allclose(sent_single, sentiment_logits, atol=1e-3))
    assert bool(jnp.allclose(sarc_single, sarcasm_logits, atol=1e-3))
    assert bool(jnp.allclose(neg_single, negation_logits, atol=1e-3))

    print("KERNEL_OK")
</pallas_src>

<mosaic_0001>
module attributes {stable_mosaic.version = 11 : i64} {
  func.func @fused_kernel(%arg0: memref<2x8x128xbf16, #tpu.memory_space<vmem>>, %arg1: memref<128x128xbf16, #tpu.memory_space<vmem>>, %arg2: memref<1x128xf32, #tpu.memory_space<vmem>>, %arg3: memref<2x384x384xbf16, #tpu.memory_space<vmem>>, %arg4: memref<2x1x384xf32, #tpu.memory_space<vmem>>, %arg5: memref<384x128xbf16, #tpu.memory_space<vmem>>, %arg6: memref<1x128xf32, #tpu.memory_space<vmem>>, %arg7: memref<8x128xf32, #tpu.memory_space<vmem>>, %arg8: memref<2x8x128xf32, #tpu.memory_space<vmem>>) attributes {dimension_semantics = [], scalar_prefetch = 0 : i64, scratch_operands = 0 : i64, tpu.core_type = #tpu.core_type<tc>} {
    %c0 = arith.constant 0 : index
    %c0_0 = arith.constant 0 : index
    %0 = vector.load %arg1[%c0, %c0_0] : memref<128x128xbf16, #tpu.memory_space<vmem>>, vector<128x128xbf16>
    %c0_1 = arith.constant 0 : index
    %c0_2 = arith.constant 0 : index
    %1 = vector.load %arg2[%c0_1, %c0_2] : memref<1x128xf32, #tpu.memory_space<vmem>>, vector<1x128xf32>
    %c0_3 = arith.constant 0 : index
    %c0_4 = arith.constant 0 : index
    %c0_5 = arith.constant 0 : index
    %2 = vector.load %arg0[%c0_3, %c0_4, %c0_5] : memref<2x8x128xbf16, #tpu.memory_space<vmem>>, vector<1x8x128xbf16>
    %3 = vector.shape_cast %2 : vector<1x8x128xbf16> to vector<8x128xbf16>
    %cst = arith.constant dense<0.000000e+00> : vector<8x128xf32>
    %4 = tpu.matmul %3, %0, %cst {dimension_numbers = #tpu.dot_dimension_numbers<[1], [0], [0], [1], [0, 0, 1, 1], [], []>} : vector<8x128xbf16>, vector<128x128xbf16>, vector<8x128xf32> -> vector<8x128xf32>
    %5 = vector.broadcast %1 : vector<1x128xf32> to vector<8x128xf32>
    %6 = arith.addf %4, %5 : vector<8x128xf32>
    %7 = math.tanh %6 : vector<8x128xf32>
    %c1 = arith.constant 1 : index
    %c0_6 = arith.constant 0 : index
    %c0_7 = arith.constant 0 : index
    %8 = vector.load %arg0[%c1, %c0_6, %c0_7] : memref<2x8x128xbf16, #tpu.memory_space<vmem>>, vector<1x8x128xbf16>
    %9 = vector.shape_cast %8 : vector<1x8x128xbf16> to vector<8x128xbf16>
    %cst_8 = arith.constant dense<0.000000e+00> : vector<8x128xf32>
    %10 = tpu.matmul %9, %0, %cst_8 {dimension_numbers = #tpu.dot_dimension_numbers<[1], [0], [0], [1], [0, 0, 1, 1], [], []>} : vector<8x128xbf16>, vector<128x128xbf16>, vector<8x128xf32> -> vector<8x128xf32>
    %11 = vector.broadcast %1 : vector<1x128xf32> to vector<8x128xf32>
    %12 = arith.addf %10, %11 : vector<8x128xf32>
    %13 = math.tanh %12 : vector<8x128xf32>
    %c0_9 = arith.constant 0 : index
    %c0_10 = arith.constant 0 : index
    %c0_11 = arith.constant 0 : index
    %14 = vector.load %arg8[%c0_9, %c0_10, %c0_11] : memref<2x8x128xf32, #tpu.memory_space<vmem>>, vector<1x8x128xf32>
    %15 = vector.shape_cast %14 : vector<1x8x128xf32> to vector<8x128xf32>
    %16 = vector.shape_cast %7 : vector<8x128xf32> to vector<1x8x128xf32>
    tpu.vector_store %arg8[%c0_9, %c0_10, %c0_11], %16 {strides = array<i32>} : memref<2x8x128xf32, #tpu.memory_space<vmem>>, vector<1x8x128xf32>,
    %c1_12 = arith.constant 1 : index
    %c0_13 = arith.constant 0 : index
    %c0_14 = arith.constant 0 : index
    %17 = vector.load %arg8[%c1_12, %c0_13, %c0_14] : memref<2x8x128xf32, #tpu.memory_space<vmem>>, vector<1x8x128xf32>
    %18 = vector.shape_cast %17 : vector<1x8x128xf32> to vector<8x128xf32>
    %19 = vector.shape_cast %13 : vector<8x128xf32> to vector<1x8x128xf32>
    tpu.vector_store %arg8[%c1_12, %c0_13, %c0_14], %19 {strides = array<i32>} : memref<2x8x128xf32, #tpu.memory_space<vmem>>, vector<1x8x128xf32>,
    %20 = tpu.concatenate %7, %7, %13 in 1 : vector<8x128xf32>, vector<8x128xf32>, vector<8x128xf32> -> vector<8x384xf32>
    %21 = arith.truncf %20 : vector<8x384xf32> to vector<8x384xbf16>
    %c0_15 = arith.constant 0 : index
    %c0_16 = arith.constant 0 : index
    %c0_17 = arith.constant 0 : index
    %22 = vector.load %arg3[%c0_15, %c0_16, %c0_17] : memref<2x384x384xbf16, #tpu.memory_space<vmem>>, vector<1x384x384xbf16>
    %23 = vector.shape_cast %22 : vector<1x384x384xbf16> to vector<384x384xbf16>
    %cst_18 = arith.constant dense<0.000000e+00> : vector<8x384xf32>
    %24 = tpu.matmul %21, %23, %cst_18 {dimension_numbers = #tpu.dot_dimension_numbers<[1], [0], [0], [1], [0, 0, 1, 1], [], []>} : vector<8x384xbf16>, vector<384x384xbf16>, vector<8x384xf32> -> vector<8x384xf32>
    %c0_19 = arith.constant 0 : index
    %c0_20 = arith.constant 0 : index
    %c0_21 = arith.constant 0 : index
    %25 = vector.load %arg4[%c0_19, %c0_20, %c0_21] : memref<2x1x384xf32, #tpu.memory_space<vmem>>, vector<1x1x384xf32>
    %26 = vector.shape_cast %25 : vector<1x1x384xf32> to vector<1x384xf32>
    %27 = vector.broadcast %26 : vector<1x384xf32> to vector<8x384xf32>
    %28 = arith.addf %24, %27 : vector<8x384xf32>
    %cst_22 = arith.constant 0.000000e+00 : f32
    %29 = vector.broadcast %cst_22 : f32 to vector<8x384xf32>
    %30 = arith.maximumf %28, %29 : vector<8x384xf32>
    %31 = arith.truncf %30 : vector<8x384xf32> to vector<8x384xbf16>
    %c1_23 = arith.constant 1 : index
    %c0_24 = arith.constant 0 : index
    %c0_25 = arith.constant 0 : index
    %32 = vector.load %arg3[%c1_23, %c0_24, %c0_25] : memref<2x384x384xbf16, #tpu.memory_space<vmem>>, vector<1x384x384xbf16>
    %33 = vector.shape_cast %32 : vector<1x384x384xbf16> to vector<384x384xbf16>
    %cst_26 = arith.constant dense<0.000000e+00> : vector<8x384xf32>
    %34 = tpu.matmul %31, %33, %cst_26 {dimension_numbers = #tpu.dot_dimension_numbers<[1], [0], [0], [1], [0, 0, 1, 1], [], []>} : vector<8x384xbf16>, vector<384x384xbf16>, vector<8x384xf32> -> vector<8x384xf32>
    %c1_27 = arith.constant 1 : index
    %c0_28 = arith.constant 0 : index
    %c0_29 = arith.constant 0 : index
    %35 = vector.load %arg4[%c1_27, %c0_28, %c0_29] : memref<2x1x384xf32, #tpu.memory_space<vmem>>, vector<1x1x384xf32>
    %36 = vector.shape_cast %35 : vector<1x1x384xf32> to vector<1x384xf32>
    %37 = vector.broadcast %36 : vector<1x384xf32> to vector<8x384xf32>
    %38 = arith.addf %34, %37 : vector<8x384xf32>
    %cst_30 = arith.constant 0.000000e+00 : f32
    %39 = vector.broadcast %cst_30 : f32 to vector<8x384xf32>
    %40 = arith.maximumf %38, %39 : vector<8x384xf32>
    %41 = arith.truncf %40 : vector<8x384xf32> to vector<8x384xbf16>
    %c0_31 = arith.constant 0 : index
    %c0_32 = arith.constant 0 : index
    %42 = vector.load %arg5[%c0_31, %c0_32] : memref<384x128xbf16, #tpu.memory_space<vmem>>, vector<384x128xbf16>
    %cst_33 = arith.constant dense<0.000000e+00> : vector<8x128xf32>
    %43 = tpu.matmul %41, %42, %cst_33 {dimension_numbers = #tpu.dot_dimension_numbers<[1], [0], [0], [1], [0, 0, 1, 1], [], []>} : vector<8x384xbf16>, vector<384x128xbf16>, vector<8x128xf32> -> vector<8x128xf32>
    %c0_34 = arith.constant 0 : index
    %c0_35 = arith.constant 0 : index
    %44 = vector.load %arg6[%c0_34, %c0_35] : memref<1x128xf32, #tpu.memory_space<vmem>>, vector<1x128xf32>
    %45 = vector.broadcast %44 : vector<1x128xf32> to vector<8x128xf32>
    %46 = arith.addf %43, %45 : vector<8x128xf32>
    %c0_36 = arith.constant 0 : index
    %c0_37 = arith.constant 0 : index
    %47 = vector.load %arg7[%c0_36, %c0_37] : memref<8x128xf32, #tpu.memory_space<vmem>>, vector<8x128xf32>
    tpu.vector_store %arg7[%c0_36, %c0_37], %46 {strides = array<i32>} : memref<8x128xf32, #tpu.memory_space<vmem>>, vector<8x128xf32>,
    return
  }
}

</mosaic_0001>

<llo_original>
// kernel: tpu_custom_call.1
$region0: #{tpu_custom_call.1}
  #allocation0 [shape = 'u32[]', space=smem, size = 0x4, offset = 0x4, fixed_abs, tag = 'smem constant byte address 0x4 - core index']
  #allocation1 [shape = 'u32[144,128]{1,0:T(1,128)}', space=vmem, size = 0x12000, scoped, tag = 'internal scratch']
  %s0 = inlined_call_operand.hbm [shape: bf16[2,8,128], index: 0, kind: input, shape index: {}]
  %s1 = inlined_call_operand.hbm [shape: bf16[128,128], index: 1, kind: input, shape index: {}]
  %s2 = inlined_call_operand.vmem [shape: f32[1,128], index: 2, kind: input, shape index: {}]
  %s3 = inlined_call_operand.hbm [shape: bf16[2,384,384], index: 3, kind: input, shape index: {}]
  %s4 = inlined_call_operand.vmem [shape: f32[2,1,384], index: 4, kind: input, shape index: {}]
  %s5 = inlined_call_operand.hbm [shape: bf16[384,128], index: 5, kind: input, shape index: {}]
  %s6 = inlined_call_operand.vmem [shape: f32[1,128], index: 6, kind: input, shape index: {}]
  %s7 = inlined_call_operand.hbm [shape: f32[8,128], index: 7, kind: output, shape index: {0}]
  %s8 = inlined_call_operand.hbm [shape: f32[2,8,128], index: 8, kind: output, shape index: {1}]
  %9 = xla_tuple %s7, %s8
  %s10 = sld [smem:[#allocation0]]
  $region62: #{tpu_custom_call.1} parent=0
    _
  %s12 = ssub.s32 1, %s10
  %s13 = scalar_select 0, %s12, %s10
  $region1: #{tpu_custom_call.1} parent=0
    #allocation2 [shape = 'u8[4096]{0}', space=vmem, size = 0x1000, scoped, tag = 'input window, operand 0, single buffered']
    #allocation3 [shape = 's32[1]{0}', space=sflag, size = 0x4, scoped, tag = 'scoped memory for tpu_custom_call.1']
    #allocation4 [shape = 's32[1]{0}', space=sflag, size = 0x4, scoped, tag = 'scoped memory for tpu_custom_call.1']
    #allocation5 [shape = 'u8[32768]{0}', space=vmem, size = 0x8000, scoped, tag = 'input window, operand 1, single buffered']
    #allocation6 [shape = 's32[1]{0}', space=sflag, size = 0x4, scoped, tag = 'scoped memory for tpu_custom_call.1']
    #allocation7 [shape = 'u8[589824]{0}', space=vmem, size = 0x90000, scoped, tag = 'input window, operand 3, single buffered']
    #allocation8 [shape = 'u8[98304]{0}', space=vmem, size = 0x18000, scoped, tag = 'input window, operand 5, single buffered']
    #allocation9 [shape = 's32[1]{0}', space=sflag, size = 0x4, scoped, tag = 'scoped memory for tpu_custom_call.1']
    #allocation10 [shape = 'u8[4096]{0}', space=vmem, size = 0x1000, scoped, tag = 'output window, operand 0, single buffered']
    #allocation11 [shape = 'u8[8192]{0}', space=vmem, size = 0x2000, scoped, tag = 'output window, operand 1, single buffered']
    #allocation12 [shape = 's32[1]{0}', space=sflag, size = 0x4, scoped, tag = 'scoped memory for tpu_custom_call.1']
    %14 = vsyncpa [#allocation3], 0
    %15 = vsyncpa [#allocation6], 0
    %16 = vsyncpa [#allocation9], 0
    %17 = vsyncpa [#allocation4], 0
    %18 = vsyncpa [#allocation12], 0
    // Predicated region
    $region2: #{tpu_custom_call.1} parent=1 // pred_check
      _
    $region3: #{tpu_custom_call.1} parent=1 // pred_check_branch
      %20 = sbr.rel (0) target = $region5
    $region4: #{tpu_custom_call.1} parent=1 // pred_region
      %s22 = ssub.s32 128, 128
      %23 = vsyncadd [#allocation3], %s22
      %s24 = sshll.u32 [#allocation2], 4
      %s25 = int_to_ptr.vmem [resolvable:$true] %s24
      %30 = dma.hbm_to_vmem [thread:$0]  %s0, 128, %s25, [#allocation3], 64, 64, 4
    $region5: #{tpu_custom_call.1} parent=1 // pred_fallthru
      _
    // Predicated region
    $region6: #{tpu_custom_call.1} parent=1 // pred_check
      _
    $region7: #{tpu_custom_call.1} parent=1 // pred_check_branch
      %32 = sbr.rel (0) target = $region9
    $region8: #{tpu_custom_call.1} parent=1 // pred_region
      %s34 = ssub.s32 1024, 1024
      %35 = vsyncadd [#allocation6], %s34
      %s36 = sshll.u32 [#allocation5], 4
      %s37 = int_to_ptr.vmem [resolvable:$true] %s36
      %42 = dma.hbm_to_vmem [thread:$0]  %s1, 1024, %s37, [#allocation6], 64, 64, 4
    $region9: #{tpu_custom_call.1} parent=1 // pred_fallthru
      _
    // Predicated region
    $region10: #{tpu_custom_call.1} parent=1 // pred_check
      _
    $region11: #{tpu_custom_call.1} parent=1 // pred_check_branch
      %44 = sbr.rel (0) target = $region13
    $region12: #{tpu_custom_call.1} parent=1 // pred_region
      _
    $region13: #{tpu_custom_call.1} parent=1 // pred_fallthru
      _
    // Predicated region
    $region14: #{tpu_custom_call.1} parent=1 // pred_check
      _
    $region15: #{tpu_custom_call.1} parent=1 // pred_check_branch
      %46 = sbr.rel (0) target = $region17
    $region16: #{tpu_custom_call.1} parent=1 // pred_region
      %s48 = ssub.s32 18432, 18432
      %49 = vsyncadd [#allocation6], %s48
      %s50 = sshll.u32 [#allocation7], 4
      %s51 = int_to_ptr.vmem [resolvable:$true] %s50
      %56 = dma.hbm_to_vmem [thread:$0]  %s3, 18432, %s51, [#allocation6], 192, 192, 12
    $region17: #{tpu_custom_call.1} parent=1 // pred_fallthru
      _
    // Predicated region
    $region18: #{tpu_custom_call.1} parent=1 // pred_check
      _
    $region19: #{tpu_custom_call.1} parent=1 // pred_check_branch
      %58 = sbr.rel (0) target = $region21
    $region20: #{tpu_custom_call.1} parent=1 // pred_region
      _
    $region21: #{tpu_custom_call.1} parent=1 // pred_fallthru
      _
    // Predicated region
    $region22: #{tpu_custom_call.1} parent=1 // pred_check
      _
    $region23: #{tpu_custom_call.1} parent=1 // pred_check_branch
      %60 = sbr.rel (0) target = $region25
    $region24: #{tpu_custom_call.1} parent=1 // pred_region
      %s62 = ssub.s32 3072, 3072
      %63 = vsyncadd [#allocation9], %s62
      %s64 = sshll.u32 [#allocation8], 4
      %s65 = int_to_ptr.vmem [resolvable:$true] %s64
      %70 = dma.hbm_to_vmem [thread:$0]  %s5, 3072, %s65, [#allocation9], 64, 64, 4
    $region25: #{tpu_custom_call.1} parent=1 // pred_fallthru
      _
    // Predicated region
    $region26: #{tpu_custom_call.1} parent=1 // pred_check
      _
    $region27: #{tpu_custom_call.1} parent=1 // pred_check_branch
      %72 = sbr.rel (0) target = $region29
    $region28: #{tpu_custom_call.1} parent=1 // pred_region
      _
    $region29: #{tpu_custom_call.1} parent=1 // pred_fallthru
      _
    // Predicated region
    $region30: #{tpu_custom_call.1} parent=1 // pred_check
      _
    $region31: #{tpu_custom_call.1} parent=1 // pred_check_branch
      %74 = sbr.rel (0) target = $region33
    $region32: #{tpu_custom_call.1} parent=1 // pred_region
      %75 = dma.done [#allocation3], 128
    $region33: #{tpu_custom_call.1} parent=1 // pred_fallthru
      _
    // Predicated region
    $region34: #{tpu_custom_call.1} parent=1 // pred_check
      _
    $region35: #{tpu_custom_call.1} parent=1 // pred_check_branch
      %77 = sbr.rel (0) target = $region37
    $region36: #{tpu_custom_call.1} parent=1 // pred_region
      %78 = dma.done [#allocation6], 1024
    $region37: #{tpu_custom_call.1} parent=1 // pred_fallthru
      _
    // Predicated region
    $region38: #{tpu_custom_call.1} parent=1 // pred_check
      _
    $region39: #{tpu_custom_call.1} parent=1 // pred_check_branch
      %80 = sbr.rel (0) target = $region41
    $region40: #{tpu_custom_call.1} parent=1 // pred_region
      %81 = dma.done [#allocation6], 18432
    $region41: #{tpu_custom_call.1} parent=1 // pred_fallthru
      _
    // Predicated region
    $region42: #{tpu_custom_call.1} parent=1 // pred_check
      _
    $region43: #{tpu_custom_call.1} parent=1 // pred_check_branch
      %83 = sbr.rel (0) target = $region45
    $region44: #{tpu_custom_call.1} parent=1 // pred_region
      %84 = dma.done [#allocation9], 3072
    $region45: #{tpu_custom_call.1} parent=1 // pred_fallthru
      _
    %v86 = vld [vmem:[#allocation5] sm:$0xf]
    %v87 = vld [vmem:[#allocation5 + $0x4] sm:$0xf]
    %v88 = vld [vmem:[#allocation5 + $0x8] sm:$0xf]
    %v89 = vld [vmem:[#allocation5 + $0xc] sm:$0xf]
    %v90 = vld [vmem:[#allocation5 + $0x10] sm:$0xf]
    %v91 = vld [vmem:[#allocation5 + $0x14] sm:$0xf]
    %v92 = vld [vmem:[#allocation5 + $0x18] sm:$0xf]
    %v93 = vld [vmem:[#allocation5 + $0x1c] sm:$0xf]
    %v94 = vld [vmem:[#allocation5 + $0x20] sm:$0xf]
    %v95 = vld [vmem:[#allocation5 + $0x24] sm:$0xf]
    %v96 = vld [vmem:[#allocation5 + $0x28] sm:$0xf]
    %v97 = vld [vmem:[#allocation5 + $0x2c] sm:$0xf]
    %v98 = vld [vmem:[#allocation5 + $0x30] sm:$0xf]
    %v99 = vld [vmem:[#allocation5 + $0x34] sm:$0xf]
    %v100 = vld [vmem:[#allocation5 + $0x38] sm:$0xf]
    %v101 = vld [vmem:[#allocation5 + $0x3c] sm:$0xf]
    %v102 = vld [vmem:[%s2] sm:$0x1]
    %v103 = vld [vmem:[#allocation2] sm:$0xf]
    %v105 = vlaneseq
    %v106 = vshrl.u32 %v105, 7
    %v107 = vsub.s32 0, %v106
    %v108 = vrot.slane %v102, %v107
    %v126 = vunpack.c.l.b16 %v86
    %v127 = vunpack.c.l.b16 %v87
    %v128 = vunpack.c.l.b16 %v88
    %v129 = vunpack.c.l.b16 %v89
    %v130 = vunpack.c.l.b16 %v90
    %v131 = vunpack.c.l.b16 %v91
    %v132 = vunpack.c.l.b16 %v92
    %v133 = vunpack.c.l.b16 %v93
    %v134 = vunpack.c.l.b16 %v94
    %v135 = vunpack.c.l.b16 %v95
    %v136 = vunpack.c.l.b16 %v96
    %v137 = vunpack.c.l.b16 %v97
    %v138 = vunpack.c.l.b16 %v98
    %v139 = vunpack.c.l.b16 %v99
    %v140 = vunpack.c.l.b16 %v100
    %v141 = vunpack.c.l.b16 %v101
    %v142 = vpack.c.b16 %v127, %v126
    %v143 = vpack.c.b16 %v129, %v128
    %v144 = vpack.c.b16 %v131, %v130
    %v145 = vpack.c.b16 %v133, %v132
    %v146 = vpack.c.b16 %v135, %v134
    %v147 = vpack.c.b16 %v137, %v136
    %v148 = vpack.c.b16 %v139, %v138
    %v149 = vpack.c.b16 %v141, %v140
    %158 = vmatprep.subr.bf16.mxu0 0
    %159 = vmatpush1.bf16.msra.mxu0 %v142
    %160 = vmatprep.subr.bf16.mxu0 0
    %161 = vmatpush1.bf16.msra.mxu0 %v143
    %162 = vmatprep.subr.bf16.mxu0 0
    %163 = vmatpush1.bf16.msra.mxu0 %v144
    %164 = vmatprep.subr.bf16.mxu0 0
    %165 = vmatpush1.bf16.msra.mxu0 %v145
    %166 = vmatprep.subr.bf16.mxu0 0
    %167 = vmatpush1.bf16.msra.mxu0 %v146
    %168 = vmatprep.subr.bf16.mxu0 0
    %169 = vmatpush1.bf16.msra.mxu0 %v147
    %170 = vmatprep.subr.bf16.mxu0 0
    %171 = vmatpush1.bf16.msra.mxu0 %v148
    %172 = vmatprep.subr.bf16.mxu0 0
    %173 = vmatpush1.bf16.msra.mxu0 %v149
    %174 = vmatprep.subr.bf16.mxu0 0
    %175 = vmatpush1.bf16.msra.mxu0 0
    %176 = vmatprep.subr.bf16.mxu0 0
    %177 = vmatpush1.bf16.msra.mxu0 0
    %178 = vmatprep.subr.bf16.mxu0 0
    %179 = vmatpush1.bf16.msra.mxu0 0
    %180 = vmatprep.subr.bf16.mxu0 0
    %181 = vmatpush1.bf16.msra.mxu0 0
    %182 = vmatprep.subr.bf16.mxu0 0
    %183 = vmatpush1.bf16.msra.mxu0 0
    %184 = vmatprep.subr.bf16.mxu0 0
    %185 = vmatpush1.bf16.msra.mxu0 0
    %186 = vmatprep.subr.bf16.mxu0 0
    %187 = vmatpush1.bf16.msra.mxu0 0
    %188 = vmatprep.subr.bf16.mxu0 0
    %189 = vmatpush1.bf16.msra.mxu0 0
    %190 = vmatprep.mubr.bf16.mxu0 0
    %191 = vmatmul.mubr.bf16.gmra.mrb[0].mxu0 %v103
    %v192 = vpop.f32.mrb[0].mxu0
    %v193 = vadd.f32 %v108, %v192
    %v194 = vpop.f32.mrb[0].mxu0
    %v195 = vpop.f32.mrb[0].mxu0
    %v196 = vpop.f32.mrb[0].mxu0
    %197 = vdwg.mxu0
    %v198 = vtanh.pop %v193
    %s199 = scalar_lea.vmem [#allocation2], 4
    %v200 = vld [vmem:[%s199] sm:$0xf]
    %201 = vmatprep.subr.bf16.mxu0 0
    %202 = vmatpush1.bf16.msra.mxu0 %v142
    %203 = vmatprep.subr.bf16.mxu0 0
    %204 = vmatpush1.bf16.msra.mxu0 %v143
    %205 = vmatprep.subr.bf16.mxu0 0
    %206 = vmatpush1.bf16.msra.mxu0 %v144
    %207 = vmatprep.subr.bf16.mxu0 0
    %208 = vmatpush1.bf16.msra.mxu0 %v145
    %209 = vmatprep.subr.bf16.mxu0 0
    %210 = vmatpush1.bf16.msra.mxu0 %v146
    %211 = vmatprep.subr.bf16.mxu0 0
    %212 = vmatpush1.bf16.msra.mxu0 %v147
    %213 = vmatprep.subr.bf16.mxu0 0
    %214 = vmatpush1.bf16.msra.mxu0 %v148
    %215 = vmatprep.subr.bf16.mxu0 0
    %216 = vmatpush1.bf16.msra.mxu0 %v149
    %217 = vmatprep.subr.bf16.mxu0 0
    %218 = vmatpush1.bf16.msra.mxu0 0
    %219 = vmatprep.subr.bf16.mxu0 0
    %220 = vmatpush1.bf16.msra.mxu0 0
    %221 = vmatprep.subr.bf16.mxu0 0
    %222 = vmatpush1.bf16.msra.mxu0 0
    %223 = vmatprep.subr.bf16.mxu0 0
    %224 = vmatpush1.bf16.msra.mxu0 0
    %225 = vmatprep.subr.bf16.mxu0 0
    %226 = vmatpush1.bf16.msra.mxu0 0
    %227 = vmatprep.subr.bf16.mxu0 0
    %228 = vmatpush1.bf16.msra.mxu0 0
    %229 = vmatprep.subr.bf16.mxu0 0
    %230 = vmatpush1.bf16.msra.mxu0 0
    %231 = vmatprep.subr.bf16.mxu0 0
    %232 = vmatpush1.bf16.msra.mxu0 0
    %233 = vmatprep.mubr.bf16.mxu0 0
    %234 = vmatmul.mubr.bf16.gmra.mrb[0].mxu0 %v200
    %v235 = vpop.f32.mrb[0].mxu0
    %v236 = vadd.f32 %v108, %v235
    %v237 = vpop.f32.mrb[0].mxu0
    %v238 = vpop.f32.mrb[0].mxu0
    %v239 = vpop.f32.mrb[0].mxu0
    %240 = vdwg.mxu0
    %v241 = vtanh.pop %v236
    %242 = vst [vmem:[#allocation11] sm:$0xff] %v198
    %s243 = scalar_lea.vmem [#allocation11], 8
    %244 = vst [vmem:[%s243] sm:$0xff] %v241
    %v245 = vpack.c.bf16 %v198, %v198
    %v246 = vpack.c.bf16 %v241, %v241
    %v247 = vld [vmem:[#allocation7] sm:$0xff]
    %v248 = vld [vmem:[#allocation7 + $0x8] sm:$0xf]
    %v249 = vld [vmem:[#allocation7 + $0xc] sm:$0xff]
    %v250 = vld [vmem:[#allocation7 + $0x14] sm:$0xf]
    %v251 = vld [vmem:[#allocation7 + $0x18] sm:$0xff]
    %v252 = vld [vmem:[#allocation7 + $0x20] sm:$0xf]
    %v253 = vld [vmem:[#allocation7 + $0x24] sm:$0xff]
    %v254 = vld [vmem:[#allocation7 + $0x2c] sm:$0xf]
    %v255 = vld [vmem:[#allocation7 + $0x30] sm:$0xff]
    %v256 = vld [vmem:[#allocation7 + $0x38] sm:$0xf]
    %v257 = vld [vmem:[#allocation7 + $0x3c] sm:$0xff]
    %v258 = vld [vmem:[#allocation7 + $0x44] sm:$0xf]
    %v259 = vld [vmem:[#allocation7 + $0x48] sm:$0xff]
    %v260 = vld [vmem:[#allocation7 + $0x50] sm:$0xf]
    %v261 = vld [vmem:[#allocation7 + $0x54] sm:$0xff]
    %v262 = vld [vmem:[#allocation7 + $0x5c] sm:$0xf]
    %v263 = vld [vmem:[#allocation7 + $0x60] sm:$0xff]
    %v264 = vld [vmem:[#allocation7 + $0x68] sm:$0xf]
    %v265 = vld [vmem:[#allocation7 + $0x6c] sm:$0xff]
    %v266 = vld [vmem:[#allocation7 + $0x74] sm:$0xf]
    %v267 = vld [vmem:[#allocation7 + $0x78] sm:$0xff]
    %v268 = vld [vmem:[#allocation7 + $0x80] sm:$0xf]
    %v269 = vld [vmem:[#allocation7 + $0x84] sm:$0xff]
    %v270 = vld [vmem:[#allocation7 + $0x8c] sm:$0xf]
    %v271 = vld [vmem:[#allocation7 + $0x90] sm:$0xff]
    %v272 = vld [vmem:[#allocation7 + $0x98] sm:$0xf]
    %v273 = vld [vmem:[#allocation7 + $0x9c] sm:$0xff]
    %v274 = vld [vmem:[#allocation7 + $0xa4] sm:$0xf]
    %v275 = vld [vmem:[#allocation7 + $0xa8] sm:$0xff]
    %v276 = vld [vmem:[#allocation7 + $0xb0] sm:$0xf]
    %v277 = vld [vmem:[#allocation7 + $0xb4] sm:$0xff]
    %v278 = vld [vmem:[#allocation7 + $0xbc] sm:$0xf]
    %v279 = vld [vmem:[#allocation7 + $0xc0] sm:$0xff]
    %v280 = vld [vmem:[#allocation7 + $0xc8] sm:$0xf]
    %v281 = vld [vmem:[#allocation7 + $0xcc] sm:$0xff]
    %v282 = vld [vmem:[#allocation7 + $0xd4] sm:$0xf]
    %v283 = vld [vmem:[#allocation7 + $0xd8] sm:$0xff]
    %v284 = vld [vmem:[#allocation7 + $0xe0] sm:$0xf]
    %v285 = vld [vmem:[#allocation7 + $0xe4] sm:$0xff]
    %v286 = vld [vmem:[#allocation7 + $0xec] sm:$0xf]
    %v287 = vld [vmem:[#allocation7 + $0xf0] sm:$0xff]
    %v288 = vld [vmem:[#allocation7 + $0xf8] sm:$0xf]
    %v289 = vld [vmem:[#allocation7 + $0xfc] sm:$0xff]
    %v290 = vld [vmem:[#allocation7 + $0x104] sm:$0xf]
    %v291 = vld [vmem:[#allocation7 + $0x108] sm:$0xff]
    %v292 = vld [vmem:[#allocation7 + $0x110] sm:$0xf]
    %v293 = vld [vmem:[#allocation7 + $0x114] sm:$0xff]
    %v294 = vld [vmem:[#allocation7 + $0x11c] sm:$0xf]
    %v295 = vld [vmem:[#allocation7 + $0x120] sm:$0xff]
    %v296 = vld [vmem:[#allocation7 + $0x128] sm:$0xf]
    %v297 = vld [vmem:[#allocation7 + $0x12c] sm:$0xff]
    %v298 = vld [vmem:[#allocation7 + $0x134] sm:$0xf]
    %v299 = vld [vmem:[#allocation7 + $0x138] sm:$0xff]
    %v300 = vld [vmem:[#allocation7 + $0x140] sm:$0xf]
    %v301 = vld [vmem:[#allocation7 + $0x144] sm:$0xff]
    %v302 = vld [vmem:[#allocation7 + $0x14c] sm:$0xf]
    %v303 = vld [vmem:[#allocation7 + $0x150] sm:$0xff]
    %v304 = vld [vmem:[#allocation7 + $0x158] sm:$0xf]
    %v305 = vld [vmem:[#allocation7 + $0x15c] sm:$0xff]
    %v306 = vld [vmem:[#allocation7 + $0x164] sm:$0xf]
    %v307 = vld [vmem:[#allocation7 + $0x168] sm:$0xff]
    %v308 = vld [vmem:[#allocation7 + $0x170] sm:$0xf]
    %v309 = vld [vmem:[#allocation7 + $0x174] sm:$0xff]
    %v310 = vld [vmem:[#allocation7 + $0x17c] sm:$0xf]
    %v311 = vld [vmem:[#allocation7 + $0x180] sm:$0xff]
    %v312 = vld [vmem:[#allocation7 + $0x188] sm:$0xf]
    %v313 = vld [vmem:[#allocation7 + $0x18c] sm:$0xff]
    %v314 = vld [vmem:[#allocation7 + $0x194] sm:$0xf]
    %v315 = vld [vmem:[#allocation7 + $0x198] sm:$0xff]
    %v316 = vld [vmem:[#allocation7 + $0x1a0] sm:$0xf]
    %v317 = vld [vmem:[#allocation7 + $0x1a4] sm:$0xff]
    %v318 = vld [vmem:[#allocation7 + $0x1ac] sm:$0xf]
    %v319 = vld [vmem:[#allocation7 + $0x1b0] sm:$0xff]
    %v320 = vld [vmem:[#allocation7 + $0x1b8] sm:$0xf]
    %v321 = vld [vmem:[#allocation7 + $0x1bc] sm:$0xff]
    %v322 = vld [vmem:[#allocation7 + $0x1c4] sm:$0xf]
    %v323 = vld [vmem:[#allocation7 + $0x1c8] sm:$0xff]
    %v324 = vld [vmem:[#allocation7 + $0x1d0] sm:$0xf]
    %v325 = vld [vmem:[#allocation7 + $0x1d4] sm:$0xff]
    %v326 = vld [vmem:[#allocation7 + $0x1dc] sm:$0xf]
    %v327 = vld [vmem:[#allocation7 + $0x1e0] sm:$0xff]
    %v328 = vld [vmem:[#allocation7 + $0x1e8] sm:$0xf]
    %v329 = vld [vmem:[#allocation7 + $0x1ec] sm:$0xff]
    %v330 = vld [vmem:[#allocation7 + $0x1f4] sm:$0xf]
    %v331 = vld [vmem:[#allocation7 + $0x1f8] sm:$0xff]
    %v332 = vld [vmem:[#allocation7 + $0x200] sm:$0xf]
    %v333 = vld [vmem:[#allocation7 + $0x204] sm:$0xff]
    %v334 = vld [vmem:[#allocation7 + $0x20c] sm:$0xf]
    %v335 = vld [vmem:[#allocation7 + $0x210] sm:$0xff]
    %v336 = vld [vmem:[#allocation7 + $0x218] sm:$0xf]
    %v337 = vld [vmem:[#allocation7 + $0x21c] sm:$0xff]
    %v338 = vld [vmem:[#allocation7 + $0x224] sm:$0xf]
    %v339 = vld [vmem:[#allocation7 + $0x228] sm:$0xff]
    %v340 = vld [vmem:[#allocation7 + $0x230] sm:$0xf]
    %v341 = vld [vmem:[#allocation7 + $0x234] sm:$0xff]
    %v342 = vld [vmem:[#allocation7 + $0x23c] sm:$0xf]
    %v343 = vld [vmem:[%s4] sm:$0x7]
    %v345 = vlaneseq
    %v346 = vshrl.u32 %v345, 7
    %v347 = vsub.s32 0, %v346
    %v348 = vrot.slane %v343, %v347
    %v349 = vlaneseq
    %v350 = vshrl.u32 %v349, 7
    %v351 = vsub.s32 1, %v350
    %v352 = vrot.slane %v343, %v351
    %v353 = vlaneseq
    %v354 = vshrl.u32 %v353, 7
    %v355 = vsub.s32 2, %v354
    %v356 = vrot.slane %v343, %v355
    %v456 = vunpack.c.l.b16 %v247
    %v457 = vunpack.c.h.b16 %v247
    %v458 = vunpack.c.l.b16 %v248
    %v459 = vunpack.c.l.b16 %v249
    %v460 = vunpack.c.h.b16 %v249
    %v461 = vunpack.c.l.b16 %v250
    %v462 = vunpack.c.l.b16 %v251
    %v463 = vunpack.c.h.b16 %v251
    %v464 = vunpack.c.l.b16 %v252
    %v465 = vunpack.c.l.b16 %v253
    %v466 = vunpack.c.h.b16 %v253
    %v467 = vunpack.c.l.b16 %v254
    %v468 = vunpack.c.l.b16 %v255
    %v469 = vunpack.c.h.b16 %v255
    %v470 = vunpack.c.l.b16 %v256
    %v471 = vunpack.c.l.b16 %v257
    %v472 = vunpack.c.h.b16 %v257
    %v473 = vunpack.c.l.b16 %v258
    %v474 = vunpack.c.l.b16 %v259
    %v475 = vunpack.c.h.b16 %v259
    %v476 = vunpack.c.l.b16 %v260
    %v477 = vunpack.c.l.b16 %v261
    %v478 = vunpack.c.h.b16 %v261
    %v479 = vunpack.c.l.b16 %v262
    %v480 = vunpack.c.l.b16 %v263
    %v481 = vunpack.c.h.b16 %v263
    %v482 = vunpack.c.l.b16 %v264
    %v483 = vunpack.c.l.b16 %v265
    %v484 = vunpack.c.h.b16 %v265
    %v485 = vunpack.c.l.b16 %v266
    %v486 = vunpack.c.l.b16 %v267
    %v487 = vunpack.c.h.b16 %v267
    %v488 = vunpack.c.l.b16 %v268
    %v489 = vunpack.c.l.b16 %v269
    %v490 = vunpack.c.h.b16 %v269
    %v491 = vunpack.c.l.b16 %v270
    %v492 = vunpack.c.l.b16 %v271
    %v493 = vunpack.c.h.b16 %v271
    %v494 = vunpack.c.l.b16 %v272
    %v495 = vunpack.c.l.b16 %v273
    %v496 = vunpack.c.h.b16 %v273
    %v497 = vunpack.c.l.b16 %v274
    %v498 = vunpack.c.l.b16 %v275
    %v499 = vunpack.c.h.b16 %v275
    %v500 = vunpack.c.l.b16 %v276
    %v501 = vunpack.c.l.b16 %v277
    %v502 = vunpack.c.h.b16 %v277
    %v503 = vunpack.c.l.b16 %v278
    %v504 = vunpack.c.l.b16 %v279
    %v505 = vunpack.c.h.b16 %v279
    %v506 = vunpack.c.l.b16 %v280
    %v507 = vunpack.c.l.b16 %v281
    %v508 = vunpack.c.h.b16 %v281
    %v509 = vunpack.c.l.b16 %v282
    %v510 = vunpack.c.l.b16 %v283
    %v511 = vunpack.c.h.b16 %v283
    %v512 = vunpack.c.l.b16 %v284
    %v513 = vunpack.c.l.b16 %v285
    %v514 = vunpack.c.h.b16 %v285
    %v515 = vunpack.c.l.b16 %v286
    %v516 = vunpack.c.l.b16 %v287
    %v517 = vunpack.c.h.b16 %v287
    %v518 = vunpack.c.l.b16 %v288
    %v519 = vunpack.c.l.b16 %v289
    %v520 = vunpack.c.h.b16 %v289
    %v521 = vunpack.c.l.b16 %v290
    %v522 = vunpack.c.l.b16 %v291
    %v523 = vunpack.c.h.b16 %v291
    %v524 = vunpack.c.l.b16 %v292
    %v525 = vunpack.c.l.b16 %v293
    %v526 = vunpack.c.h.b16 %v293
    %v527 = vunpack.c.l.b16 %v294
    %v528 = vunpack.c.l.b16 %v295
    %v529 = vunpack.c.h.b16 %v295
    %v530 = vunpack.c.l.b16 %v296
    %v531 = vunpack.c.l.b16 %v297
    %v532 = vunpack.c.h.b16 %v297
    %v533 = vunpack.c.l.b16 %v298
    %v534 = vunpack.c.l.b16 %v299
    %v535 = vunpack.c.h.b16 %v299
    %v536 = vunpack.c.l.b16 %v300
    %v537 = vunpack.c.l.b16 %v301
    %v538 = vunpack.c.h.b16 %v301
    %v539 = vunpack.c.l.b16 %v302
    %v540 = vunpack.c.l.b16 %v303
    %v541 = vunpack.c.h.b16 %v303
    %v542 = vunpack.c.l.b16 %v304
    %v543 = vunpack.c.l.b16 %v305
    %v544 = vunpack.c.h.b16 %v305
    %v545 = vunpack.c.l.b16 %v306
    %v546 = vunpack.c.l.b16 %v307
    %v547 = vunpack.c.h.b16 %v307
    %v548 = vunpack.c.l.b16 %v308
    %v549 = vunpack.c.l.b16 %v309
    %v550 = vunpack.c.h.b16 %v309
    %v551 = vunpack.c.l.b16 %v310
    %v552 = vunpack.c.l.b16 %v311
    %v553 = vunpack.c.h.b16 %v311
    %v554 = vunpack.c.l.b16 %v312
    %v555 = vunpack.c.l.b16 %v313
    %v556 = vunpack.c.h.b16 %v313
    %v557 = vunpack.c.l.b16 %v314
    %v558 = vunpack.c.l.b16 %v315
    %v559 = vunpack.c.h.b16 %v315
    %v560 = vunpack.c.l.b16 %v316
    %v561 = vunpack.c.l.b16 %v317
    %v562 = vunpack.c.h.b16 %v317
    %v563 = vunpack.c.l.b16 %v318
    %v564 = vunpack.c.l.b16 %v319
    %v565 = vunpack.c.h.b16 %v319
    %v566 = vunpack.c.l.b16 %v320
    %v567 = vunpack.c.l.b16 %v321
    %v568 = vunpack.c.h.b16 %v321
    %v569 = vunpack.c.l.b16 %v322
    %v570 = vunpack.c.l.b16 %v323
    %v571 = vunpack.c.h.b16 %v323
    %v572 = vunpack.c.l.b16 %v324
    %v573 = vunpack.c.l.b16 %v325
    %v574 = vunpack.c.h.b16 %v325
    %v575 = vunpack.c.l.b16 %v326
    %v576 = vunpack.c.l.b16 %v327
    %v577 = vunpack.c.h.b16 %v327
    %v578 = vunpack.c.l.b16 %v328
    %v579 = vunpack.c.l.b16 %v329
    %v580 = vunpack.c.h.b16 %v329
    %v581 = vunpack.c.l.b16 %v330
    %v582 = vunpack.c.l.b16 %v331
    %v583 = vunpack.c.h.b16 %v331
    %v584 = vunpack.c.l.b16 %v332
    %v585 = vunpack.c.l.b16 %v333
    %v586 = vunpack.c.h.b16 %v333
    %v587 = vunpack.c.l.b16 %v334
    %v588 = vunpack.c.l.b16 %v335
    %v589 = vunpack.c.h.b16 %v335
    %v590 = vunpack.c.l.b16 %v336
    %v591 = vunpack.c.l.b16 %v337
    %v592 = vunpack.c.h.b16 %v337
    %v593 = vunpack.c.l.b16 %v338
    %v594 = vunpack.c.l.b16 %v339
    %v595 = vunpack.c.h.b16 %v339
    %v596 = vunpack.c.l.b16 %v340
    %v597 = vunpack.c.l.b16 %v341
    %v598 = vunpack.c.h.b16 %v341
    %v599 = vunpack.c.l.b16 %v342
    %v600 = vpack.c.b16 %v459, %v456
    %v601 = vpack.c.b16 %v460, %v457
    %v602 = vpack.c.b16 %v461, %v458
    %v603 = vpack.c.b16 %v465, %v462
    %v604 = vpack.c.b16 %v466, %v463
    %v605 = vpack.c.b16 %v467, %v464
    %v606 = vpack.c.b16 %v471, %v468
    %v607 = vpack.c.b16 %v472, %v469
    %v608 = vpack.c.b16 %v473, %v470
    %v609 = vpack.c.b16 %v477, %v474
    %v610 = vpack.c.b16 %v478, %v475
    %v611 = vpack.c.b16 %v479, %v476
    %v612 = vpack.c.b16 %v483, %v480
    %v613 = vpack.c.b16 %v484, %v481
    %v614 = vpack.c.b16 %v485, %v482
    %v615 = vpack.c.b16 %v489, %v486
    %v616 = vpack.c.b16 %v490, %v487
    %v617 = vpack.c.b16 %v491, %v488
    %v618 = vpack.c.b16 %v495, %v492
    %v619 = vpack.c.b16 %v496, %v493
    %v620 = vpack.c.b16 %v497, %v494
    %v621 = vpack.c.b16 %v501, %v498
    %v622 = vpack.c.b16 %v502, %v499
    %v623 = vpack.c.b16 %v503, %v500
    %v624 = vpack.c.b16 %v507, %v504
    %v625 = vpack.c.b16 %v508, %v505
    %v626 = vpack.c.b16 %v509, %v506
    %v627 = vpack.c.b16 %v513, %v510
    %v628 = vpack.c.b16 %v514, %v511
    %v629 = vpack.c.b16 %v515, %v512
    %v630 = vpack.c.b16 %v519, %v516
    %v631 = vpack.c.b16 %v520, %v517
    %v632 = vpack.c.b16 %v521, %v518
    %v633 = vpack.c.b16 %v525, %v522
    %v634 = vpack.c.b16 %v526, %v523
    %v635 = vpack.c.b16 %v527, %v524
    %v636 = vpack.c.b16 %v531, %v528
    %v637 = vpack.c.b16 %v532, %v529
    %v638 = vpack.c.b16 %v533, %v530
    %v639 = vpack.c.b16 %v537, %v534
    %v640 = vpack.c.b16 %v538, %v535
    %v641 = vpack.c.b16 %v539, %v536
    %v642 = vpack.c.b16 %v543, %v540
    %v643 = vpack.c.b16 %v544, %v541
    %v644 = vpack.c.b16 %v545, %v542
    %v645 = vpack.c.b16 %v549, %v546
    %v646 = vpack.c.b16 %v550, %v547
    %v647 = vpack.c.b16 %v551, %v548
    %v648 = vpack.c.b16 %v555, %v552
    %v649 = vpack.c.b16 %v556, %v553
    %v650 = vpack.c.b16 %v557, %v554
    %v651 = vpack.c.b16 %v561, %v558
    %v652 = vpack.c.b16 %v562, %v559
    %v653 = vpack.c.b16 %v563, %v560
    %v654 = vpack.c.b16 %v567, %v564
    %v655 = vpack.c.b16 %v568, %v565
    %v656 = vpack.c.b16 %v569, %v566
    %v657 = vpack.c.b16 %v573, %v570
    %v658 = vpack.c.b16 %v574, %v571
    %v659 = vpack.c.b16 %v575, %v572
    %v660 = vpack.c.b16 %v579, %v576
    %v661 = vpack.c.b16 %v580, %v577
    %v662 = vpack.c.b16 %v581, %v578
    %v663 = vpack.c.b16 %v585, %v582
    %v664 = vpack.c.b16 %v586, %v583
    %v665 = vpack.c.b16 %v587, %v584
    %v666 = vpack.c.b16 %v591, %v588
    %v667 = vpack.c.b16 %v592, %v589
    %v668 = vpack.c.b16 %v593, %v590
    %v669 = vpack.c.b16 %v597, %v594
    %v670 = vpack.c.b16 %v598, %v595
    %v671 = vpack.c.b16 %v599, %v596
    %744 = vmatprep.subr.bf16.mxu0 %v601
    %745 = vmatpush1.bf16.msra.mxu0 %v600
    %746 = vmatprep.subr.bf16.mxu0 %v604
    %747 = vmatpush1.bf16.msra.mxu0 %v603
    %748 = vmatprep.subr.bf16.mxu0 %v607
    %749 = vmatpush1.bf16.msra.mxu0 %v606
    %750 = vmatprep.subr.bf16.mxu0 %v610
    %751 = vmatpush1.bf16.msra.mxu0 %v609
    %752 = vmatprep.subr.bf16.mxu0 %v613
    %753 = vmatpush1.bf16.msra.mxu0 %v612
    %754 = vmatprep.subr.bf16.mxu0 %v616
    %755 = vmatpush1.bf16.msra.mxu0 %v615
    %756 = vmatprep.subr.bf16.mxu0 %v619
    %757 = vmatpush1.bf16.msra.mxu0 %v618
    %758 = vmatprep.subr.bf16.mxu0 %v622
    %759 = vmatpush1.bf16.msra.mxu0 %v621
    %760 = vmatprep.subr.bf16.mxu0 %v625
    %761 = vmatpush1.bf16.msra.mxu0 %v624
    %762 = vmatprep.subr.bf16.mxu0 %v628
    %763 = vmatpush1.bf16.msra.mxu0 %v627
    %764 = vmatprep.subr.bf16.mxu0 %v631
    %765 = vmatpush1.bf16.msra.mxu0 %v630
    %766 = vmatprep.subr.bf16.mxu0 %v634
    %767 = vmatpush1.bf16.msra.mxu0 %v633
    %768 = vmatprep.subr.bf16.mxu0 %v637
    %769 = vmatpush1.bf16.msra.mxu0 %v636
    %770 = vmatprep.subr.bf16.mxu0 %v640
    %771 = vmatpush1.bf16.msra.mxu0 %v639
    %772 = vmatprep.subr.bf16.mxu0 %v643
    %773 = vmatpush1.bf16.msra.mxu0 %v642
    %774 = vmatprep.subr.bf16.mxu0 %v646
    %775 = vmatpush1.bf16.msra.mxu0 %v645
    %776 = vmatprep.mubr.bf16.mxu0 %v245
    %777 = vmatmul.mubr.bf16.gmra.mrb[0].mxu0 %v245
    %v778 = vpop.f32.mrb[0].mxu0
    %v779 = vadd.f32 %v348, %v778
    %v780 = vpop.f32.mrb[0].mxu0
    %v781 = vadd.f32 %v352, %v780
    %v782 = vpop.f32.mrb[0].mxu0
    %v783 = vpop.f32.mrb[0].mxu0
    %784 = vdwg.mxu0
    %785 = vmatprep.subr.bf16.mxu0 %v649
    %786 = vmatpush1.bf16.msra.mxu0 %v648
    %787 = vmatprep.subr.bf16.mxu0 %v652
    %788 = vmatpush1.bf16.msra.mxu0 %v651
    %789 = vmatprep.subr.bf16.mxu0 %v655
    %790 = vmatpush1.bf16.msra.mxu0 %v654
    %791 = vmatprep.subr.bf16.mxu0 %v658
    %792 = vmatpush1.bf16.msra.mxu0 %v657
    %793 = vmatprep.subr.bf16.mxu0 %v661
    %794 = vmatpush1.bf16.msra.mxu0 %v660
    %795 = vmatprep.subr.bf16.mxu0 %v664
    %796 = vmatpush1.bf16.msra.mxu0 %v663
    %797 = vmatprep.subr.bf16.mxu0 %v667
    %798 = vmatpush1.bf16.msra.mxu0 %v666
    %799 = vmatprep.subr.bf16.mxu0 %v670
    %800 = vmatpush1.bf16.msra.mxu0 %v669
    %801 = vmatprep.subr.bf16.mxu0 0
    %802 = vmatpush1.bf16.msra.mxu0 0
    %803 = vmatprep.subr.bf16.mxu0 0
    %804 = vmatpush1.bf16.msra.mxu0 0
    %805 = vmatprep.subr.bf16.mxu0 0
    %806 = vmatpush1.bf16.msra.mxu0 0
    %807 = vmatprep.subr.bf16.mxu0 0
    %808 = vmatpush1.bf16.msra.mxu0 0
    %809 = vmatprep.subr.bf16.mxu0 0
    %810 = vmatpush1.bf16.msra.mxu0 0
    %811 = vmatprep.subr.bf16.mxu0 0
    %812 = vmatpush1.bf16.msra.mxu0 0
    %813 = vmatprep.subr.bf16.mxu0 0
    %814 = vmatpush1.bf16.msra.mxu0 0
    %815 = vmatprep.subr.bf16.mxu0 0
    %816 = vmatpush1.bf16.msra.mxu0 0
    %817 = vmatprep.mubr.bf16.mxu0 0
    %818 = vmatmul.mubr.bf16.gmra.mrb[0].mxu0 %v246
    %v819 = vpop.f32.mrb[0].mxu0
    %v820 = vadd.f32 %v779, %v819
    %v821 = vpop.f32.mrb[0].mxu0
    %v822 = vadd.f32 %v781, %v821
    %v823 = vpop.f32.mrb[0].mxu0
    %v824 = vpop.f32.mrb[0].mxu0
    %825 = vdwg.mxu0
    %826 = vmatprep.subr.bf16.mxu0 0
    %827 = vmatpush1.bf16.msra.mxu0 %v602
    %828 = vmatprep.subr.bf16.mxu0 0
    %829 = vmatpush1.bf16.msra.mxu0 %v605
    %830 = vmatprep.subr.bf16.mxu0 0
    %831 = vmatpush1.bf16.msra.mxu0 %v608
    %832 = vmatprep.subr.bf16.mxu0 0
    %833 = vmatpush1.bf16.msra.mxu0 %v611
    %834 = vmatprep.subr.bf16.mxu0 0
    %835 = vmatpush1.bf16.msra.mxu0 %v614
    %836 = vmatprep.subr.bf16.mxu0 0
    %837 = vmatpush1.bf16.msra.mxu0 %v617
    %838 = vmatprep.subr.bf16.mxu0 0
    %839 = vmatpush1.bf16.msra.mxu0 %v620
    %840 = vmatprep.subr.bf16.mxu0 0
    %841 = vmatpush1.bf16.msra.mxu0 %v623
    %842 = vmatprep.subr.bf16.mxu0 0
    %843 = vmatpush1.bf16.msra.mxu0 %v626
    %844 = vmatprep.subr.bf16.mxu0 0
    %845 = vmatpush1.bf16.msra.mxu0 %v629
    %846 = vmatprep.subr.bf16.mxu0 0
    %847 = vmatpush1.bf16.msra.mxu0 %v632
    %848 = vmatprep.subr.bf16.mxu0 0
    %849 = vmatpush1.bf16.msra.mxu0 %v635
    %850 = vmatprep.subr.bf16.mxu0 0
    %851 = vmatpush1.bf16.msra.mxu0 %v638
    %852 = vmatprep.subr.bf16.mxu0 0
    %853 = vmatpush1.bf16.msra.mxu0 %v641
    %854 = vmatprep.subr.bf16.mxu0 0
    %855 = vmatpush1.bf16.msra.mxu0 %v644
    %856 = vmatprep.subr.bf16.mxu0 0
    %857 = vmatpush1.bf16.msra.mxu0 %v647
    %858 = vmatprep.mubr.bf16.mxu0 %v245
    %859 = vmatmul.mubr.bf16.gmra.mrb[0].mxu0 %v245
    %v860 = vpop.f32.mrb[0].mxu0
    %v861 = vadd.f32 %v356, %v860
    %v862 = vpop.f32.mrb[0].mxu0
    %v863 = vpop.f32.mrb[0].mxu0
    %v864 = vpop.f32.mrb[0].mxu0
    %865 = vdwg.mxu0
    %866 = vmatprep.subr.bf16.mxu0 0
    %867 = vmatpush1.bf16.msra.mxu0 %v650
    %868 = vmatprep.subr.bf16.mxu0 0
    %869 = vmatpush1.bf16.msra.mxu0 %v653
    %870 = vmatprep.subr.bf16.mxu0 0
    %871 = vmatpush1.bf16.msra.mxu0 %v656
    %872 = vmatprep.subr.bf16.mxu0 0
    %873 = vmatpush1.bf16.msra.mxu0 %v659
    %874 = vmatprep.subr.bf16.mxu0 0
    %875 = vmatpush1.bf16.msra.mxu0 %v662
    %876 = vmatprep.subr.bf16.mxu0 0
    %877 = vmatpush1.bf16.msra.mxu0 %v665
    %878 = vmatprep.subr.bf16.mxu0 0
    %879 = vmatpush1.bf16.msra.mxu0 %v668
    %880 = vmatprep.subr.bf16.mxu0 0
    %881 = vmatpush1.bf16.msra.mxu0 %v671
    %882 = vmatprep.subr.bf16.mxu0 0
    %883 = vmatpush1.bf16.msra.mxu0 0
    %884 = vmatprep.subr.bf16.mxu0 0
    %885 = vmatpush1.bf16.msra.mxu0 0
    %886 = vmatprep.subr.bf16.mxu0 0
    %887 = vmatpush1.bf16.msra.mxu0 0
    %888 = vmatprep.subr.bf16.mxu0 0
    %889 = vmatpush1.bf16.msra.mxu0 0
    %890 = vmatprep.subr.bf16.mxu0 0
    %891 = vmatpush1.bf16.msra.mxu0 0
    %892 = vmatprep.subr.bf16.mxu0 0
    %893 = vmatpush1.bf16.msra.mxu0 0
    %894 = vmatprep.subr.bf16.mxu0 0
    %895 = vmatpush1.bf16.msra.mxu0 0
    %896 = vmatprep.subr.bf16.mxu0 0
    %897 = vmatpush1.bf16.msra.mxu0 0
    %898 = vmatprep.mubr.bf16.mxu0 0
    %899 = vmatmul.mubr.bf16.gmra.mrb[0].mxu0 %v246
    %v900 = vpop.f32.mrb[0].mxu0
    %v901 = vadd.f32 %v861, %v900
    %v902 = vpop.f32.mrb[0].mxu0
    %v903 = vpop.f32.mrb[0].mxu0
    %v904 = vpop.f32.mrb[0].mxu0
    %905 = vdwg.mxu0
    %v906 = vmax.f32 %v820, 0.0
    %v907 = vmax.f32 %v822, 0.0
    %v908 = vmax.f32 %v901, 0.0
    %v909 = vpack.c.bf16 %v906, %v906
    %v910 = vpack.c.bf16 %v907, %v907
    %v911 = vpack.c.bf16 %v908, %v908
    %s912 = scalar_lea.vmem [#allocation7], 576
    %v913 = vld [vmem:[%s912] sm:$0xff]
    %v914 = vld [vmem:[%s912 + $0x8] sm:$0xf]
    %v915 = vld [vmem:[%s912 + $0xc] sm:$0xff]
    %v916 = vld [vmem:[%s912 + $0x14] sm:$0xf]
    %v917 = vld [vmem:[%s912 + $0x18] sm:$0xff]
    %v918 = vld [vmem:[%s912 + $0x20] sm:$0xf]
    %v919 = vld [vmem:[%s912 + $0x24] sm:$0xff]
    %v920 = vld [vmem:[%s912 + $0x2c] sm:$0xf]
    %v921 = vld [vmem:[%s912 + $0x30] sm:$0xff]
    %v922 = vld [vmem:[%s912 + $0x38] sm:$0xf]
    %v923 = vld [vmem:[%s912 + $0x3c] sm:$0xff]
    %v924 = vld [vmem:[%s912 + $0x44] sm:$0xf]
    %v925 = vld [vmem:[%s912 + $0x48] sm:$0xff]
    %v926 = vld [vmem:[%s912 + $0x50] sm:$0xf]
    %v927 = vld [vmem:[%s912 + $0x54] sm:$0xff]
    %v928 = vld [vmem:[%s912 + $0x5c] sm:$0xf]
    %v929 = vld [vmem:[%s912 + $0x60] sm:$0xff]
    %v930 = vld [vmem:[%s912 + $0x68] sm:$0xf]
    %v931 = vld [vmem:[%s912 + $0x6c] sm:$0xff]
    %v932 = vld [vmem:[%s912 + $0x74] sm:$0xf]
    %v933 = vld [vmem:[%s912 + $0x78] sm:$0xff]
    %v934 = vld [vmem:[%s912 + $0x80] sm:$0xf]
    %v935 = vld [vmem:[%s912 + $0x84] sm:$0xff]
    %v936 = vld [vmem:[%s912 + $0x8c] sm:$0xf]
    %v937 = vld [vmem:[%s912 + $0x90] sm:$0xff]
    %v938 = vld [vmem:[%s912 + $0x98] sm:$0xf]
    %v939 = vld [vmem:[%s912 + $0x9c] sm:$0xff]
    %v940 = vld [vmem:[%s912 + $0xa4] sm:$0xf]
    %v941 = vld [vmem:[%s912 + $0xa8] sm:$0xff]
    %v942 = vld [vmem:[%s912 + $0xb0] sm:$0xf]
    %v943 = vld [vmem:[%s912 + $0xb4] sm:$0xff]
    %v944 = vld [vmem:[%s912 + $0xbc] sm:$0xf]
    %v945 = vld [vmem:[%s912 + $0xc0] sm:$0xff]
    %v946 = vld [vmem:[%s912 + $0xc8] sm:$0xf]
    %v947 = vld [vmem:[%s912 + $0xcc] sm:$0xff]
    %v948 = vld [vmem:[%s912 + $0xd4] sm:$0xf]
    %v949 = vld [vmem:[%s912 + $0xd8] sm:$0xff]
    %v950 = vld [vmem:[%s912 + $0xe0] sm:$0xf]
    %v951 = vld [vmem:[%s912 + $0xe4] sm:$0xff]
    %v952 = vld [vmem:[%s912 + $0xec] sm:$0xf]
    %v953 = vld [vmem:[%s912 + $0xf0] sm:$0xff]
    %v954 = vld [vmem:[%s912 + $0xf8] sm:$0xf]
    %v955 = vld [vmem:[%s912 + $0xfc] sm:$0xff]
    %v956 = vld [vmem:[%s912 + $0x104] sm:$0xf]
    %v957 = vld [vmem:[%s912 + $0x108] sm:$0xff]
    %v958 = vld [vmem:[%s912 + $0x110] sm:$0xf]
    %v959 = vld [vmem:[%s912 + $0x114] sm:$0xff]
    %v960 = vld [vmem:[%s912 + $0x11c] sm:$0xf]
    %v961 = vld [vmem:[%s912 + $0x120] sm:$0xff]
    %v962 = vld [vmem:[%s912 + $0x128] sm:$0xf]
    %v963 = vld [vmem:[%s912 + $0x12c] sm:$0xff]
    %v964 = vld [vmem:[%s912 + $0x134] sm:$0xf]
    %v965 = vld [vmem:[%s912 + $0x138] sm:$0xff]
    %v966 = vld [vmem:[%s912 + $0x140] sm:$0xf]
    %v967 = vld [vmem:[%s912 + $0x144] sm:$0xff]
    %v968 = vld [vmem:[%s912 + $0x14c] sm:$0xf]
    %v969 = vld [vmem:[%s912 + $0x150] sm:$0xff]
    %v970 = vld [vmem:[%s912 + $0x158] sm:$0xf]
    %v971 = vld [vmem:[%s912 + $0x15c] sm:$0xff]
    %v972 = vld [vmem:[%s912 + $0x164] sm:$0xf]
    %v973 = vld [vmem:[%s912 + $0x168] sm:$0xff]
    %v974 = vld [vmem:[%s912 + $0x170] sm:$0xf]
    %v975 = vld [vmem:[%s912 + $0x174] sm:$0xff]
    %v976 = vld [vmem:[%s912 + $0x17c] sm:$0xf]
    %v977 = vld [vmem:[%s912 + $0x180] sm:$0xff]
    %v978 = vld [vmem:[%s912 + $0x188] sm:$0xf]
    %v979 = vld [vmem:[%s912 + $0x18c] sm:$0xff]
    %v980 = vld [vmem:[%s912 + $0x194] sm:$0xf]
    %v981 = vld [vmem:[%s912 + $0x198] sm:$0xff]
    %v982 = vld [vmem:[%s912 + $0x1a0] sm:$0xf]
    %v983 = vld [vmem:[%s912 + $0x1a4] sm:$0xff]
    %v984 = vld [vmem:[%s912 + $0x1ac] sm:$0xf]
    %v985 = vld [vmem:[%s912 + $0x1b0] sm:$0xff]
    %v986 = vld [vmem:[%s912 + $0x1b8] sm:$0xf]
    %v987 = vld [vmem:[%s912 + $0x1bc] sm:$0xff]
    %v988 = vld [vmem:[%s912 + $0x1c4] sm:$0xf]
    %v989 = vld [vmem:[%s912 + $0x1c8] sm:$0xff]
    %v990 = vld [vmem:[%s912 + $0x1d0] sm:$0xf]
    %v991 = vld [vmem:[%s912 + $0x1d4] sm:$0xff]
    %v992 = vld [vmem:[%s912 + $0x1dc] sm:$0xf]
    %v993 = vld [vmem:[%s912 + $0x1e0] sm:$0xff]
    %v994 = vld [vmem:[%s912 + $0x1e8] sm:$0xf]
    %v995 = vld [vmem:[%s912 + $0x1ec] sm:$0xff]
    %v996 = vld [vmem:[%s912 + $0x1f4] sm:$0xf]
    %v997 = vld [vmem:[%s912 + $0x1f8] sm:$0xff]
    %v998 = vld [vmem:[%s912 + $0x200] sm:$0xf]
    %v999 = vld [vmem:[%s912 + $0x204] sm:$0xff]
    %v1000 = vld [vmem:[%s912 + $0x20c] sm:$0xf]
    %v1001 = vld [vmem:[%s912 + $0x210] sm:$0xff]
    %v1002 = vld [vmem:[%s912 + $0x218] sm:$0xf]
    %v1003 = vld [vmem:[%s912 + $0x21c] sm:$0xff]
    %v1004 = vld [vmem:[%s912 + $0x224] sm:$0xf]
    %v1005 = vld [vmem:[%s912 + $0x228] sm:$0xff]
    %v1006 = vld [vmem:[%s912 + $0x230] sm:$0xf]
    %v1007 = vld [vmem:[%s912 + $0x234] sm:$0xff]
    %v1008 = vld [vmem:[%s912 + $0x23c] sm:$0xf]
    %s1009 = scalar_lea.vmem %s4, 3
    %v1010 = vld [vmem:[%s1009] sm:$0x7]
    %v1012 = vlaneseq
    %v1013 = vshrl.u32 %v1012, 7
    %v1014 = vsub.s32 0, %v1013
    %v1015 = vrot.slane %v1010, %v1014
    %v1016 = vlaneseq
    %v1017 = vshrl.u32 %v1016, 7
    %v1018 = vsub.s32 1, %v1017
    %v1019 = vrot.slane %v1010, %v1018
    %v1020 = vlaneseq
    %v1021 = vshrl.u32 %v1020, 7
    %v1022 = vsub.s32 2, %v1021
    %v1023 = vrot.slane %v1010, %v1022
    %v1123 = vunpack.c.l.b16 %v913
    %v1124 = vunpack.c.h.b16 %v913
    %v1125 = vunpack.c.l.b16 %v914
    %v1126 = vunpack.c.l.b16 %v915
    %v1127 = vunpack.c.h.b16 %v915
    %v1128 = vunpack.c.l.b16 %v916
    %v1129 = vunpack.c.l.b16 %v917
    %v1130 = vunpack.c.h.b16 %v917
    %v1131 = vunpack.c.l.b16 %v918
    %v1132 = vunpack.c.l.b16 %v919
    %v1133 = vunpack.c.h.b16 %v919
    %v1134 = vunpack.c.l.b16 %v920
    %v1135 = vunpack.c.l.b16 %v921
    %v1136 = vunpack.c.h.b16 %v921
    %v1137 = vunpack.c.l.b16 %v922
    %v1138 = vunpack.c.l.b16 %v923
    %v1139 = vunpack.c.h.b16 %v923
    %v1140 = vunpack.c.l.b16 %v924
    %v1141 = vunpack.c.l.b16 %v925
    %v1142 = vunpack.c.h.b16 %v925
    %v1143 = vunpack.c.l.b16 %v926
    %v1144 = vunpack.c.l.b16 %v927
    %v1145 = vunpack.c.h.b16 %v927
    %v1146 = vunpack.c.l.b16 %v928
    %v1147 = vunpack.c.l.b16 %v929
    %v1148 = vunpack.c.h.b16 %v929
    %v1149 = vunpack.c.l.b16 %v930
    %v1150 = vunpack.c.l.b16 %v931
    %v1151 = vunpack.c.h.b16 %v931
    %v1152 = vunpack.c.l.b16 %v932
    %v1153 = vunpack.c.l.b16 %v933
    %v1154 = vunpack.c.h.b16 %v933
    %v1155 = vunpack.c.l.b16 %v934
    %v1156 = vunpack.c.l.b16 %v935
    %v1157 = vunpack.c.h.b16 %v935
    %v1158 = vunpack.c.l.b16 %v936
    %v1159 = vunpack.c.l.b16 %v937
    %v1160 = vunpack.c.h.b16 %v937
    %v1161 = vunpack.c.l.b16 %v938
    %v1162 = vunpack.c.l.b16 %v939
    %v1163 = vunpack.c.h.b16 %v939
    %v1164 = vunpack.c.l.b16 %v940
    %v1165 = vunpack.c.l.b16 %v941
    %v1166 = vunpack.c.h.b16 %v941
    %v1167 = vunpack.c.l.b16 %v942
    %v1168 = vunpack.c.l.b16 %v943
    %v1169 = vunpack.c.h.b16 %v943
    %v1170 = vunpack.c.l.b16 %v944
    %v1171 = vunpack.c.l.b16 %v945
    %v1172 = vunpack.c.h.b16 %v945
    %v1173 = vunpack.c.l.b16 %v946
    %v1174 = vunpack.c.l.b16 %v947
    %v1175 = vunpack.c.h.b16 %v947
    %v1176 = vunpack.c.l.b16 %v948
    %v1177 = vunpack.c.l.b16 %v949
    %v1178 = vunpack.c.h.b16 %v949
    %v1179 = vunpack.c.l.b16 %v950
    %v1180 = vunpack.c.l.b16 %v951
    %v1181 = vunpack.c.h.b16 %v951
    %v1182 = vunpack.c.l.b16 %v952
    %v1183 = vunpack.c.l.b16 %v953
    %v1184 = vunpack.c.h.b16 %v953
    %v1185 = vunpack.c.l.b16 %v954
    %v1186 = vunpack.c.l.b16 %v955
    %v1187 = vunpack.c.h.b16 %v955
    %v1188 = vunpack.c.l.b16 %v956
    %v1189 = vunpack.c.l.b16 %v957
    %v1190 = vunpack.c.h.b16 %v957
    %v1191 = vunpack.c.l.b16 %v958
    %v1192 = vunpack.c.l.b16 %v959
    %v1193 = vunpack.c.h.b16 %v959
    %v1194 = vunpack.c.l.b16 %v960
    %v1195 = vunpack.c.l.b16 %v961
    %v1196 = vunpack.c.h.b16 %v961
    %v1197 = vunpack.c.l.b16 %v962
    %v1198 = vunpack.c.l.b16 %v963
    %v1199 = vunpack.c.h.b16 %v963
    %v1200 = vunpack.c.l.b16 %v964
    %v1201 = vunpack.c.l.b16 %v965
    %v1202 = vunpack.c.h.b16 %v965
    %v1203 = vunpack.c.l.b16 %v966
    %v1204 = vunpack.c.l.b16 %v967
    %v1205 = vunpack.c.h.b16 %v967
    %v1206 = vunpack.c.l.b16 %v968
    %v1207 = vunpack.c.l.b16 %v969
    %v1208 = vunpack.c.h.b16 %v969
    %v1209 = vunpack.c.l.b16 %v970
    %v1210 = vunpack.c.l.b16 %v971
    %v1211 = vunpack.c.h.b16 %v971
    %v1212 = vunpack.c.l.b16 %v972
    %v1213 = vunpack.c.l.b16 %v973
    %v1214 = vunpack.c.h.b16 %v973
    %v1215 = vunpack.c.l.b16 %v974
    %v1216 = vunpack.c.l.b16 %v975
    %v1217 = vunpack.c.h.b16 %v975
    %v1218 = vunpack.c.l.b16 %v976
    %v1219 = vunpack.c.l.b16 %v977
    %v1220 = vunpack.c.h.b16 %v977
    %v1221 = vunpack.c.l.b16 %v978
    %v1222 = vunpack.c.l.b16 %v979
    %v1223 = vunpack.c.h.b16 %v979
    %v1224 = vunpack.c.l.b16 %v980
    %v1225 = vunpack.c.l.b16 %v981
    %v1226 = vunpack.c.h.b16 %v981
    %v1227 = vunpack.c.l.b16 %v982
    %v1228 = vunpack.c.l.b16 %v983
    %v1229 = vunpack.c.h.b16 %v983
    %v1230 = vunpack.c.l.b16 %v984
    %v1231 = vunpack.c.l.b16 %v985
    %v1232 = vunpack.c.h.b16 %v985
    %v1233 = vunpack.c.l.b16 %v986
    %v1234 = vunpack.c.l.b16 %v987
    %v1235 = vunpack.c.h.b16 %v987
    %v1236 = vunpack.c.l.b16 %v988
    %v1237 = vunpack.c.l.b16 %v989
    %v1238 = vunpack.c.h.b16 %v989
    %v1239 = vunpack.c.l.b16 %v990
    %v1240 = vunpack.c.l.b16 %v991
    %v1241 = vunpack.c.h.b16 %v991
    %v1242 = vunpack.c.l.b16 %v992
    %v1243 = vunpack.c.l.b16 %v993
    %v1244 = vunpack.c.h.b16 %v993
    %v1245 = vunpack.c.l.b16 %v994
    %v1246 = vunpack.c.l.b16 %v995
    %v1247 = vunpack.c.h.b16 %v995
    %v1248 = vunpack.c.l.b16 %v996
    %v1249 = vunpack.c.l.b16 %v997
    %v1250 = vunpack.c.h.b16 %v997
    %v1251 = vunpack.c.l.b16 %v998
    %v1252 = vunpack.c.l.b16 %v999
    %v1253 = vunpack.c.h.b16 %v999
    %v1254 = vunpack.c.l.b16 %v1000
    %v1255 = vunpack.c.l.b16 %v1001
    %v1256 = vunpack.c.h.b16 %v1001
    %v1257 = vunpack.c.l.b16 %v1002
    %v1258 = vunpack.c.l.b16 %v1003
    %v1259 = vunpack.c.h.b16 %v1003
    %v1260 = vunpack.c.l.b16 %v1004
    %v1261 = vunpack.c.l.b16 %v1005
    %v1262 = vunpack.c.h.b16 %v1005
    %v1263 = vunpack.c.l.b16 %v1006
    %v1264 = vunpack.c.l.b16 %v1007
    %v1265 = vunpack.c.h.b16 %v1007
    %v1266 = vunpack.c.l.b16 %v1008
    %v1267 = vpack.c.b16 %v1126, %v1123
    %v1268 = vpack.c.b16 %v1127, %v1124
    %v1269 = vpack.c.b16 %v1128, %v1125
    %v1270 = vpack.c.b16 %v1132, %v1129
    %v1271 = vpack.c.b16 %v1133, %v1130
    %v1272 = vpack.c.b16 %v1134, %v1131
    %v1273 = vpack.c.b16 %v1138, %v1135
    %v1274 = vpack.c.b16 %v1139, %v1136
    %v1275 = vpack.c.b16 %v1140, %v1137
    %v1276 = vpack.c.b16 %v1144, %v1141
    %v1277 = vpack.c.b16 %v1145, %v1142
    %v1278 = vpack.c.b16 %v1146, %v1143
    %v1279 = vpack.c.b16 %v1150, %v1147
    %v1280 = vpack.c.b16 %v1151, %v1148
    %v1281 = vpack.c.b16 %v1152, %v1149
    %v1282 = vpack.c.b16 %v1156, %v1153
    %v1283 = vpack.c.b16 %v1157, %v1154
    %v1284 = vpack.c.b16 %v1158, %v1155
    %v1285 = vpack.c.b16 %v1162, %v1159
    %v1286 = vpack.c.b16 %v1163, %v1160
    %v1287 = vpack.c.b16 %v1164, %v1161
    %v1288 = vpack.c.b16 %v1168, %v1165
    %v1289 = vpack.c.b16 %v1169, %v1166
    %v1290 = vpack.c.b16 %v1170, %v1167
    %v1291 = vpack.c.b16 %v1174, %v1171
    %v1292 = vpack.c.b16 %v1175, %v1172
    %v1293 = vpack.c.b16 %v1176, %v1173
    %v1294 = vpack.c.b16 %v1180, %v1177
    %v1295 = vpack.c.b16 %v1181, %v1178
    %v1296 = vpack.c.b16 %v1182, %v1179
    %v1297 = vpack.c.b16 %v1186, %v1183
    %v1298 = vpack.c.b16 %v1187, %v1184
    %v1299 = vpack.c.b16 %v1188, %v1185
    %v1300 = vpack.c.b16 %v1192, %v1189
    %v1301 = vpack.c.b16 %v1193, %v1190
    %v1302 = vpack.c.b16 %v1194, %v1191
    %v1303 = vpack.c.b16 %v1198, %v1195
    %v1304 = vpack.c.b16 %v1199, %v1196
    %v1305 = vpack.c.b16 %v1200, %v1197
    %v1306 = vpack.c.b16 %v1204, %v1201
    %v1307 = vpack.c.b16 %v1205, %v1202
    %v1308 = vpack.c.b16 %v1206, %v1203
    %v1309 = vpack.c.b16 %v1210, %v1207
    %v1310 = vpack.c.b16 %v1211, %v1208
    %v1311 = vpack.c.b16 %v1212, %v1209
    %v1312 = vpack.c.b16 %v1216, %v1213
    %v1313 = vpack.c.b16 %v1217, %v1214
    %v1314 = vpack.c.b16 %v1218, %v1215
    %v1315 = vpack.c.b16 %v1222, %v1219
    %v1316 = vpack.c.b16 %v1223, %v1220
    %v1317 = vpack.c.b16 %v1224, %v1221
    %v1318 = vpack.c.b16 %v1228, %v1225
    %v1319 = vpack.c.b16 %v1229, %v1226
    %v1320 = vpack.c.b16 %v1230, %v1227
    %v1321 = vpack.c.b16 %v1234, %v1231
    %v1322 = vpack.c.b16 %v1235, %v1232
    %v1323 = vpack.c.b16 %v1236, %v1233
    %v1324 = vpack.c.b16 %v1240, %v1237
    %v1325 = vpack.c.b16 %v1241, %v1238
    %v1326 = vpack.c.b16 %v1242, %v1239
    %v1327 = vpack.c.b16 %v1246, %v1243
    %v1328 = vpack.c.b16 %v1247, %v1244
    %v1329 = vpack.c.b16 %v1248, %v1245
    %v1330 = vpack.c.b16 %v1252, %v1249
    %v1331 = vpack.c.b16 %v1253, %v1250
    %v1332 = vpack.c.b16 %v1254, %v1251
    %v1333 = vpack.c.b16 %v1258, %v1255
    %v1334 = vpack.c.b16 %v1259, %v1256
    %v1335 = vpack.c.b16 %v1260, %v1257
    %v1336 = vpack.c.b16 %v1264, %v1261
    %v1337 = vpack.c.b16 %v1265, %v1262
    %v1338 = vpack.c.b16 %v1266, %v1263
    %1411 = vmatprep.subr.bf16.mxu0 %v1268
    %1412 = vmatpush1.bf16.msra.mxu0 %v1267
    %1413 = vmatprep.subr.bf16.mxu0 %v1271
    %1414 = vmatpush1.bf16.msra.mxu0 %v1270
    %1415 = vmatprep.subr.bf16.mxu0 %v1274
    %1416 = vmatpush1.bf16.msra.mxu0 %v1273
    %1417 = vmatprep.subr.bf16.mxu0 %v1277
    %1418 = vmatpush1.bf16.msra.mxu0 %v1276
    %1419 = vmatprep.subr.bf16.mxu0 %v1280
    %1420 = vmatpush1.bf16.msra.mxu0 %v1279
    %1421 = vmatprep.subr.bf16.mxu0 %v1283
    %1422 = vmatpush1.bf16.msra.mxu0 %v1282
    %1423 = vmatprep.subr.bf16.mxu0 %v1286
    %1424 = vmatpush1.bf16.msra.mxu0 %v1285
    %1425 = vmatprep.subr.bf16.mxu0 %v1289
    %1426 = vmatpush1.bf16.msra.mxu0 %v1288
    %1427 = vmatprep.subr.bf16.mxu0 %v1292
    %1428 = vmatpush1.bf16.msra.mxu0 %v1291
    %1429 = vmatprep.subr.bf16.mxu0 %v1295
    %1430 = vmatpush1.bf16.msra.mxu0 %v1294
    %1431 = vmatprep.subr.bf16.mxu0 %v1298
    %1432 = vmatpush1.bf16.msra.mxu0 %v1297
    %1433 = vmatprep.subr.bf16.mxu0 %v1301
    %1434 = vmatpush1.bf16.msra.mxu0 %v1300
    %1435 = vmatprep.subr.bf16.mxu0 %v1304
    %1436 = vmatpush1.bf16.msra.mxu0 %v1303
    %1437 = vmatprep.subr.bf16.mxu0 %v1307
    %1438 = vmatpush1.bf16.msra.mxu0 %v1306
    %1439 = vmatprep.subr.bf16.mxu0 %v1310
    %1440 = vmatpush1.bf16.msra.mxu0 %v1309
    %1441 = vmatprep.subr.bf16.mxu0 %v1313
    %1442 = vmatpush1.bf16.msra.mxu0 %v1312
    %1443 = vmatprep.mubr.bf16.mxu0 %v910
    %1444 = vmatmul.mubr.bf16.gmra.mrb[0].mxu0 %v909
    %v1445 = vpop.f32.mrb[0].mxu0
    %v1446 = vadd.f32 %v1015, %v1445
    %v1447 = vpop.f32.mrb[0].mxu0
    %v1448 = vadd.f32 %v1019, %v1447
    %v1449 = vpop.f32.mrb[0].mxu0
    %v1450 = vpop.f32.mrb[0].mxu0
    %1451 = vdwg.mxu0
    %1452 = vmatprep.subr.bf16.mxu0 %v1316
    %1453 = vmatpush1.bf16.msra.mxu0 %v1315
    %1454 = vmatprep.subr.bf16.mxu0 %v1319
    %1455 = vmatpush1.bf16.msra.mxu0 %v1318
    %1456 = vmatprep.subr.bf16.mxu0 %v1322
    %1457 = vmatpush1.bf16.msra.mxu0 %v1321
    %1458 = vmatprep.subr.bf16.mxu0 %v1325
    %1459 = vmatpush1.bf16.msra.mxu0 %v1324
    %1460 = vmatprep.subr.bf16.mxu0 %v1328
    %1461 = vmatpush1.bf16.msra.mxu0 %v1327
    %1462 = vmatprep.subr.bf16.mxu0 %v1331
    %1463 = vmatpush1.bf16.msra.mxu0 %v1330
    %1464 = vmatprep.subr.bf16.mxu0 %v1334
    %1465 = vmatpush1.bf16.msra.mxu0 %v1333
    %1466 = vmatprep.subr.bf16.mxu0 %v1337
    %1467 = vmatpush1.bf16.msra.mxu0 %v1336
    %1468 = vmatprep.subr.bf16.mxu0 0
    %1469 = vmatpush1.bf16.msra.mxu0 0
    %1470 = vmatprep.subr.bf16.mxu0 0
    %1471 = vmatpush1.bf16.msra.mxu0 0
    %1472 = vmatprep.subr.bf16.mxu0 0
    %1473 = vmatpush1.bf16.msra.mxu0 0
    %1474 = vmatprep.subr.bf16.mxu0 0
    %1475 = vmatpush1.bf16.msra.mxu0 0
    %1476 = vmatprep.subr.bf16.mxu0 0
    %1477 = vmatpush1.bf16.msra.mxu0 0
    %1478 = vmatprep.subr.bf16.mxu0 0
    %1479 = vmatpush1.bf16.msra.mxu0 0
    %1480 = vmatprep.subr.bf16.mxu0 0
    %1481 = vmatpush1.bf16.msra.mxu0 0
    %1482 = vmatprep.subr.bf16.mxu0 0
    %1483 = vmatpush1.bf16.msra.mxu0 0
    %1484 = vmatprep.mubr.bf16.mxu0 0
    %1485 = vmatmul.mubr.bf16.gmra.mrb[0].mxu0 %v911
    %v1486 = vpop.f32.mrb[0].mxu0
    %v1487 = vadd.f32 %v1446, %v1486
    %v1488 = vpop.f32.mrb[0].mxu0
    %v1489 = vadd.f32 %v1448, %v1488
    %v1490 = vpop.f32.mrb[0].mxu0
    %v1491 = vpop.f32.mrb[0].mxu0
    %1492 = vdwg.mxu0
    %1493 = vmatprep.subr.bf16.mxu0 0
    %1494 = vmatpush1.bf16.msra.mxu0 %v1269
    %1495 = vmatprep.subr.bf16.mxu0 0
    %1496 = vmatpush1.bf16.msra.mxu0 %v1272
    %1497 = vmatprep.subr.bf16.mxu0 0
    %1498 = vmatpush1.bf16.msra.mxu0 %v1275
    %1499 = vmatprep.subr.bf16.mxu0 0
    %1500 = vmatpush1.bf16.msra.mxu0 %v1278
    %1501 = vmatprep.subr.bf16.mxu0 0
    %1502 = vmatpush1.bf16.msra.mxu0 %v1281
    %1503 = vmatprep.subr.bf16.mxu0 0
    %1504 = vmatpush1.bf16.msra.mxu0 %v1284
    %1505 = vmatprep.subr.bf16.mxu0 0
    %1506 = vmatpush1.bf16.msra.mxu0 %v1287
    %1507 = vmatprep.subr.bf16.mxu0 0
    %1508 = vmatpush1.bf16.msra.mxu0 %v1290
    %1509 = vmatprep.subr.bf16.mxu0 0
    %1510 = vmatpush1.bf16.msra.mxu0 %v1293
    %1511 = vmatprep.subr.bf16.mxu0 0
    %1512 = vmatpush1.bf16.msra.mxu0 %v1296
    %1513 = vmatprep.subr.bf16.mxu0 0
    %1514 = vmatpush1.bf16.msra.mxu0 %v1299
    %1515 = vmatprep.subr.bf16.mxu0 0
    %1516 = vmatpush1.bf16.msra.mxu0 %v1302
    %1517 = vmatprep.subr.bf16.mxu0 0
    %1518 = vmatpush1.bf16.msra.mxu0 %v1305
    %1519 = vmatprep.subr.bf16.mxu0 0
    %1520 = vmatpush1.bf16.msra.mxu0 %v1308
    %1521 = vmatprep.subr.bf16.mxu0 0
    %1522 = vmatpush1.bf16.msra.mxu0 %v1311
    %1523 = vmatprep.subr.bf16.mxu0 0
    %1524 = vmatpush1.bf16.msra.mxu0 %v1314
    %1525 = vmatprep.mubr.bf16.mxu0 %v910
    %1526 = vmatmul.mubr.bf16.gmra.mrb[0].mxu0 %v909
    %v1527 = vpop.f32.mrb[0].mxu0
    %v1528 = vadd.f32 %v1023, %v1527
    %v1529 = vpop.f32.mrb[0].mxu0
    %v1530 = vpop.f32.mrb[0].mxu0
    %v1531 = vpop.f32.mrb[0].mxu0
    %1532 = vdwg.mxu0
    %1533 = vmatprep.subr.bf16.mxu0 0
    %1534 = vmatpush1.bf16.msra.mxu0 %v1317
    %1535 = vmatprep.subr.bf16.mxu0 0
    %1536 = vmatpush1.bf16.msra.mxu0 %v1320
    %1537 = vmatprep.subr.bf16.mxu0 0
    %1538 = vmatpush1.bf16.msra.mxu0 %v1323
    %1539 = vmatprep.subr.bf16.mxu0 0
    %1540 = vmatpush1.bf16.msra.mxu0 %v1326
    %1541 = vmatprep.subr.bf16.mxu0 0
    %1542 = vmatpush1.bf16.msra.mxu0 %v1329
    %1543 = vmatprep.subr.bf16.mxu0 0
    %1544 = vmatpush1.bf16.msra.mxu0 %v1332
    %1545 = vmatprep.subr.bf16.mxu0 0
    %1546 = vmatpush1.bf16.msra.mxu0 %v1335
    %1547 = vmatprep.subr.bf16.mxu0 0
    %1548 = vmatpush1.bf16.msra.mxu0 %v1338
    %1549 = vmatprep.subr.bf16.mxu0 0
    %1550 = vmatpush1.bf16.msra.mxu0 0
    %1551 = vmatprep.subr.bf16.mxu0 0
    %1552 = vmatpush1.bf16.msra.mxu0 0
    %1553 = vmatprep.subr.bf16.mxu0 0
    %1554 = vmatpush1.bf16.msra.mxu0 0
    %1555 = vmatprep.subr.bf16.mxu0 0
    %1556 = vmatpush1.bf16.msra.mxu0 0
    %1557 = vmatprep.subr.bf16.mxu0 0
    %1558 = vmatpush1.bf16.msra.mxu0 0
    %1559 = vmatprep.subr.bf16.mxu0 0
    %1560 = vmatpush1.bf16.msra.mxu0 0
    %1561 = vmatprep.subr.bf16.mxu0 0
    %1562 = vmatpush1.bf16.msra.mxu0 0
    %1563 = vmatprep.subr.bf16.mxu0 0
    %1564 = vmatpush1.bf16.msra.mxu0 0
    %1565 = vmatprep.mubr.bf16.mxu0 0
    %1566 = vmatmul.mubr.bf16.gmra.mrb[0].mxu0 %v911
    %v1567 = vpop.f32.mrb[0].mxu0
    %v1568 = vadd.f32 %v1528, %v1567
    %v1569 = vpop.f32.mrb[0].mxu0
    %v1570 = vpop.f32.mrb[0].mxu0
    %v1571 = vpop.f32.mrb[0].mxu0
    %1572 = vdwg.mxu0
    %v1573 = vmax.f32 %v1487, 0.0
    %v1574 = vmax.f32 %v1489, 0.0
    %v1575 = vmax.f32 %v1568, 0.0
    %v1576 = vpack.c.bf16 %v1573, %v1573
    %v1577 = vpack.c.bf16 %v1574, %v1574
    %v1578 = vpack.c.bf16 %v1575, %v1575
    %v1579 = vld [vmem:[#allocation8] sm:$0xf]
    %v1580 = vld [vmem:[#allocation8 + $0x4] sm:$0xf]
    %v1581 = vld [vmem:[#allocation8 + $0x8] sm:$0xf]
    %v1582 = vld [vmem:[#allocation8 + $0xc] sm:$0xf]
    %v1583 = vld [vmem:[#allocation8 + $0x10] sm:$0xf]
    %v1584 = vld [vmem:[#allocation8 + $0x14] sm:$0xf]
    %v1585 = vld [vmem:[#allocation8 + $0x18] sm:$0xf]
    %v1586 = vld [vmem:[#allocation8 + $0x1c] sm:$0xf]
    %v1587 = vld [vmem:[#allocation8 + $0x20] sm:$0xf]
    %v1588 = vld [vmem:[#allocation8 + $0x24] sm:$0xf]
    %v1589 = vld [vmem:[#allocation8 + $0x28] sm:$0xf]
    %v1590 = vld [vmem:[#allocation8 + $0x2c] sm:$0xf]
    %v1591 = vld [vmem:[#allocation8 + $0x30] sm:$0xf]
    %v1592 = vld [vmem:[#allocation8 + $0x34] sm:$0xf]
    %v1593 = vld [vmem:[#allocation8 + $0x38] sm:$0xf]
    %v1594 = vld [vmem:[#allocation8 + $0x3c] sm:$0xf]
    %v1595 = vld [vmem:[#allocation8 + $0x40] sm:$0xf]
    %v1596 = vld [vmem:[#allocation8 + $0x44] sm:$0xf]
    %v1597 = vld [vmem:[#allocation8 + $0x48] sm:$0xf]
    %v1598 = vld [vmem:[#allocation8 + $0x4c] sm:$0xf]
    %v1599 = vld [vmem:[#allocation8 + $0x50] sm:$0xf]
    %v1600 = vld [vmem:[#allocation8 + $0x54] sm:$0xf]
    %v1601 = vld [vmem:[#allocation8 + $0x58] sm:$0xf]
    %v1602 = vld [vmem:[#allocation8 + $0x5c] sm:$0xf]
    %v1603 = vld [vmem:[#allocation8 + $0x60] sm:$0xf]
    %v1604 = vld [vmem:[#allocation8 + $0x64] sm:$0xf]
    %v1605 = vld [vmem:[#allocation8 + $0x68] sm:$0xf]
    %v1606 = vld [vmem:[#allocation8 + $0x6c] sm:$0xf]
    %v1607 = vld [vmem:[#allocation8 + $0x70] sm:$0xf]
    %v1608 = vld [vmem:[#allocation8 + $0x74] sm:$0xf]
    %v1609 = vld [vmem:[#allocation8 + $0x78] sm:$0xf]
    %v1610 = vld [vmem:[#allocation8 + $0x7c] sm:$0xf]
    %v1611 = vld [vmem:[#allocation8 + $0x80] sm:$0xf]
    %v1612 = vld [vmem:[#allocation8 + $0x84] sm:$0xf]
    %v1613 = vld [vmem:[#allocation8 + $0x88] sm:$0xf]
    %v1614 = vld [vmem:[#allocation8 + $0x8c] sm:$0xf]
    %v1615 = vld [vmem:[#allocation8 + $0x90] sm:$0xf]
    %v1616 = vld [vmem:[#allocation8 + $0x94] sm:$0xf]
    %v1617 = vld [vmem:[#allocation8 + $0x98] sm:$0xf]
    %v1618 = vld [vmem:[#allocation8 + $0x9c] sm:$0xf]
    %v1619 = vld [vmem:[#allocation8 + $0xa0] sm:$0xf]
    %v1620 = vld [vmem:[#allocation8 + $0xa4] sm:$0xf]
    %v1621 = vld [vmem:[#allocation8 + $0xa8] sm:$0xf]
    %v1622 = vld [vmem:[#allocation8 + $0xac] sm:$0xf]
    %v1623 = vld [vmem:[#allocation8 + $0xb0] sm:$0xf]
    %v1624 = vld [vmem:[#allocation8 + $0xb4] sm:$0xf]
    %v1625 = vld [vmem:[#allocation8 + $0xb8] sm:$0xf]
    %v1626 = vld [vmem:[#allocation8 + $0xbc] sm:$0xf]
    %v1627 = vld [vmem:[%s6] sm:$0x1]
    %v1629 = vlaneseq
    %v1630 = vshrl.u32 %v1629, 7
    %v1631 = vsub.s32 0, %v1630
    %v1632 = vrot.slane %v1627, %v1631
    %v1682 = vunpack.c.l.b16 %v1579
    %v1683 = vunpack.c.l.b16 %v1580
    %v1684 = vunpack.c.l.b16 %v1581
    %v1685 = vunpack.c.l.b16 %v1582
    %v1686 = vunpack.c.l.b16 %v1583
    %v1687 = vunpack.c.l.b16 %v1584
    %v1688 = vunpack.c.l.b16 %v1585
    %v1689 = vunpack.c.l.b16 %v1586
    %v1690 = vunpack.c.l.b16 %v1587
    %v1691 = vunpack.c.l.b16 %v1588
    %v1692 = vunpack.c.l.b16 %v1589
    %v1693 = vunpack.c.l.b16 %v1590
    %v1694 = vunpack.c.l.b16 %v1591
    %v1695 = vunpack.c.l.b16 %v1592
    %v1696 = vunpack.c.l.b16 %v1593
    %v1697 = vunpack.c.l.b16 %v1594
    %v1698 = vunpack.c.l.b16 %v1595
    %v1699 = vunpack.c.l.b16 %v1596
    %v1700 = vunpack.c.l.b16 %v1597
    %v1701 = vunpack.c.l.b16 %v1598
    %v1702 = vunpack.c.l.b16 %v1599
    %v1703 = vunpack.c.l.b16 %v1600
    %v1704 = vunpack.c.l.b16 %v1601
    %v1705 = vunpack.c.l.b16 %v1602
    %v1706 = vunpack.c.l.b16 %v1603
    %v1707 = vunpack.c.l.b16 %v1604
    %v1708 = vunpack.c.l.b16 %v1605
    %v1709 = vunpack.c.l.b16 %v1606
    %v1710 = vunpack.c.l.b16 %v1607
    %v1711 = vunpack.c.l.b16 %v1608
    %v1712 = vunpack.c.l.b16 %v1609
    %v1713 = vunpack.c.l.b16 %v1610
    %v1714 = vunpack.c.l.b16 %v1611
    %v1715 = vunpack.c.l.b16 %v1612
    %v1716 = vunpack.c.l.b16 %v1613
    %v1717 = vunpack.c.l.b16 %v1614
    %v1718 = vunpack.c.l.b16 %v1615
    %v1719 = vunpack.c.l.b16 %v1616
    %v1720 = vunpack.c.l.b16 %v1617
    %v1721 = vunpack.c.l.b16 %v1618
    %v1722 = vunpack.c.l.b16 %v1619
    %v1723 = vunpack.c.l.b16 %v1620
    %v1724 = vunpack.c.l.b16 %v1621
    %v1725 = vunpack.c.l.b16 %v1622
    %v1726 = vunpack.c.l.b16 %v1623
    %v1727 = vunpack.c.l.b16 %v1624
    %v1728 = vunpack.c.l.b16 %v1625
    %v1729 = vunpack.c.l.b16 %v1626
    %v1730 = vpack.c.b16 %v1683, %v1682
    %v1731 = vpack.c.b16 %v1685, %v1684
    %v1732 = vpack.c.b16 %v1687, %v1686
    %v1733 = vpack.c.b16 %v1689, %v1688
    %v1734 = vpack.c.b16 %v1691, %v1690
    %v1735 = vpack.c.b16 %v1693, %v1692
    %v1736 = vpack.c.b16 %v1695, %v1694
    %v1737 = vpack.c.b16 %v1697, %v1696
    %v1738 = vpack.c.b16 %v1699, %v1698
    %v1739 = vpack.c.b16 %v1701, %v1700
    %v1740 = vpack.c.b16 %v1703, %v1702
    %v1741 = vpack.c.b16 %v1705, %v1704
    %v1742 = vpack.c.b16 %v1707, %v1706
    %v1743 = vpack.c.b16 %v1709, %v1708
    %v1744 = vpack.c.b16 %v1711, %v1710
    %v1745 = vpack.c.b16 %v1713, %v1712
    %v1746 = vpack.c.b16 %v1715, %v1714
    %v1747 = vpack.c.b16 %v1717, %v1716
    %v1748 = vpack.c.b16 %v1719, %v1718
    %v1749 = vpack.c.b16 %v1721, %v1720
    %v1750 = vpack.c.b16 %v1723, %v1722
    %v1751 = vpack.c.b16 %v1725, %v1724
    %v1752 = vpack.c.b16 %v1727, %v1726
    %v1753 = vpack.c.b16 %v1729, %v1728
    %1778 = vmatprep.subr.bf16.mxu0 0
    %1779 = vmatpush1.bf16.msra.mxu0 %v1730
    %1780 = vmatprep.subr.bf16.mxu0 0
    %1781 = vmatpush1.bf16.msra.mxu0 %v1731
    %1782 = vmatprep.subr.bf16.mxu0 0
    %1783 = vmatpush1.bf16.msra.mxu0 %v1732
    %1784 = vmatprep.subr.bf16.mxu0 0
    %1785 = vmatpush1.bf16.msra.mxu0 %v1733
    %1786 = vmatprep.subr.bf16.mxu0 0
    %1787 = vmatpush1.bf16.msra.mxu0 %v1734
    %1788 = vmatprep.subr.bf16.mxu0 0
    %1789 = vmatpush1.bf16.msra.mxu0 %v1735
    %1790 = vmatprep.subr.bf16.mxu0 0
    %1791 = vmatpush1.bf16.msra.mxu0 %v1736
    %1792 = vmatprep.subr.bf16.mxu0 0
    %1793 = vmatpush1.bf16.msra.mxu0 %v1737
    %1794 = vmatprep.subr.bf16.mxu0 0
    %1795 = vmatpush1.bf16.msra.mxu0 %v1738
    %1796 = vmatprep.subr.bf16.mxu0 0
    %1797 = vmatpush1.bf16.msra.mxu0 %v1739
    %1798 = vmatprep.subr.bf16.mxu0 0
    %1799 = vmatpush1.bf16.msra.mxu0 %v1740
    %1800 = vmatprep.subr.bf16.mxu0 0
    %1801 = vmatpush1.bf16.msra.mxu0 %v1741
    %1802 = vmatprep.subr.bf16.mxu0 0
    %1803 = vmatpush1.bf16.msra.mxu0 %v1742
    %1804 = vmatprep.subr.bf16.mxu0 0
    %1805 = vmatpush1.bf16.msra.mxu0 %v1743
    %1806 = vmatprep.subr.bf16.mxu0 0
    %1807 = vmatpush1.bf16.msra.mxu0 %v1744
    %1808 = vmatprep.subr.bf16.mxu0 0
    %1809 = vmatpush1.bf16.msra.mxu0 %v1745
    %1810 = vmatprep.mubr.bf16.mxu0 %v1577
    %1811 = vmatmul.mubr.bf16.gmra.mrb[0].mxu0 %v1576
    %v1812 = vpop.f32.mrb[0].mxu0
    %v1813 = vadd.f32 %v1632, %v1812
    %v1814 = vpop.f32.mrb[0].mxu0
    %v1815 = vpop.f32.mrb[0].mxu0
    %v1816 = vpop.f32.mrb[0].mxu0
    %1817 = vdwg.mxu0
    %1818 = vmatprep.subr.bf16.mxu0 0
    %1819 = vmatpush1.bf16.msra.mxu0 %v1746
    %1820 = vmatprep.subr.bf16.mxu0 0
    %1821 = vmatpush1.bf16.msra.mxu0 %v1747
    %1822 = vmatprep.subr.bf16.mxu0 0
    %1823 = vmatpush1.bf16.msra.mxu0 %v1748
    %1824 = vmatprep.subr.bf16.mxu0 0
    %1825 = vmatpush1.bf16.msra.mxu0 %v1749
    %1826 = vmatprep.subr.bf16.mxu0 0
    %1827 = vmatpush1.bf16.msra.mxu0 %v1750
    %1828 = vmatprep.subr.bf16.mxu0 0
    %1829 = vmatpush1.bf16.msra.mxu0 %v1751
    %1830 = vmatprep.subr.bf16.mxu0 0
    %1831 = vmatpush1.bf16.msra.mxu0 %v1752
    %1832 = vmatprep.subr.bf16.mxu0 0
    %1833 = vmatpush1.bf16.msra.mxu0 %v1753
    %1834 = vmatprep.subr.bf16.mxu0 0
    %1835 = vmatpush1.bf16.msra.mxu0 0
    %1836 = vmatprep.subr.bf16.mxu0 0
    %1837 = vmatpush1.bf16.msra.mxu0 0
    %1838 = vmatprep.subr.bf16.mxu0 0
    %1839 = vmatpush1.bf16.msra.mxu0 0
    %1840 = vmatprep.subr.bf16.mxu0 0
    %1841 = vmatpush1.bf16.msra.mxu0 0
    %1842 = vmatprep.subr.bf16.mxu0 0
    %1843 = vmatpush1.bf16.msra.mxu0 0
    %1844 = vmatprep.subr.bf16.mxu0 0
    %1845 = vmatpush1.bf16.msra.mxu0 0
    %1846 = vmatprep.subr.bf16.mxu0 0
    %1847 = vmatpush1.bf16.msra.mxu0 0
    %1848 = vmatprep.subr.bf16.mxu0 0
    %1849 = vmatpush1.bf16.msra.mxu0 0
    %1850 = vmatprep.mubr.bf16.mxu0 0
    %1851 = vmatmul.mubr.bf16.gmra.mrb[0].mxu0 %v1578
    %v1852 = vpop.f32.mrb[0].mxu0
    %v1853 = vadd.f32 %v1813, %v1852
    %v1854 = vpop.f32.mrb[0].mxu0
    %v1855 = vpop.f32.mrb[0].mxu0
    %v1856 = vpop.f32.mrb[0].mxu0
    %1857 = vdwg.mxu0
    %1858 = vst [vmem:[#allocation10] sm:$0xff] %v1853
    // Predicated region
    $region46: #{tpu_custom_call.1} parent=1 // pred_check
      _
    $region47: #{tpu_custom_call.1} parent=1 // pred_check_branch
      %1860 = sbr.rel (0) target = $region49
    $region48: #{tpu_custom_call.1} parent=1 // pred_region
      %s1862 = ssub.s32 128, 128
      %1863 = vsyncadd [#allocation4], %s1862
      %s1865 = sshll.u32 [#allocation10], 4
      %s1866 = int_to_ptr.vmem [resolvable:$true] %s1865
      %1868 = dma.vmem_to_hbm [thread:$0]  %s1866, 128, %s7, [#allocation4]
    $region49: #{tpu_custom_call.1} parent=1 // pred_fallthru
      _
    // Predicated region
    $region50: #{tpu_custom_call.1} parent=1 // pred_check
      _
    $region51: #{tpu_custom_call.1} parent=1 // pred_check_branch
      %1870 = sbr.rel (0) target = $region53
    $region52: #{tpu_custom_call.1} parent=1 // pred_region
      %s1872 = ssub.s32 256, 256
      %1873 = vsyncadd [#allocation12], %s1872
      %s1874 = sshll.u32 [#allocation11], 4
      %s1875 = int_to_ptr.vmem [resolvable:$true] %s1874
      %1880 = dma.vmem_to_hbm [thread:$0]  %s1875, 256, %s8, [#allocation12], 128, 128, 8
    $region53: #{tpu_custom_call.1} parent=1 // pred_fallthru
      _
    // Predicated region
    $region54: #{tpu_custom_call.1} parent=1 // pred_check
      _
    $region55: #{tpu_custom_call.1} parent=1 // pred_check_branch
      %1882 = sbr.rel (0) target = $region57
    $region56: #{tpu_custom_call.1} parent=1 // pred_region
      %1883 = dma.done [#allocation4], 128
    $region57: #{tpu_custom_call.1} parent=1 // pred_fallthru
      _
    // Predicated region
    $region58: #{tpu_custom_call.1} parent=1 // pred_check
      _
    $region59: #{tpu_custom_call.1} parent=1 // pred_check_branch
      %1885 = sbr.rel (0) target = $region61
    $region60: #{tpu_custom_call.1} parent=1 // pred_region
      %1886 = dma.done [#allocation12], 256
    $region61: #{tpu_custom_call.1} parent=1 // pred_fallthru
      _
    %1887 = vsyncpa [#allocation3], 1
    %1888 = vsyncpa [#allocation6], 1
    %1889 = vsyncpa [#allocation9], 1
    %1890 = vsyncpa [#allocation4], 1
    %1891 = vsyncpa [#allocation12], 1

</llo_original>
